<compile_context>
chip_gen: v7x
topology: tpu7x:2x2x1
jax: 0.10.0
libtpu: 0.0.40
codegen_flags: <defaults>
</compile_context>

<pallas_src>
import jax
import jax.numpy as jnp
from jax.experimental import pallas as pl
from jax.experimental.pallas import tpu as pltpu


def _lstm_kernel(xflat_ref,        # (T*B, F)   bf16  time-major, batch-flat
                 wih0_ref,         # (F, 4H)    bf16
                 whh0_ref,         # (H, 4H)    bf16
                 b0_ref,           # (1, 4H)    f32   (b_ih0 + b_hh0)
                 wih1_ref,         # (H, 4H)    bf16
                 whh1_ref,         # (H, 4H)    bf16
                 b1_ref,           # (1, 4H)    f32   (b_ih1 + b_hh1)
                 wfc_ref,          # (1, H)     f32
                 bfc_ref,          # (1, 1)     f32
                 out_ref,          # (B, 1)     f32
                 xproj_ref):       # (T*B, 4H)  f32  VMEM scratch
    TB = xflat_ref.shape[0]
    B = out_ref.shape[0]
    H = whh0_ref.shape[0]
    T = TB // B

    # ---- Hoisted layer-0 input projection: one bf16 MXU matmul (f32 accum)
    #      off the serial recurrence path, with b0 folded in.  Parked in VMEM
    #      scratch so the loop never holds a (T*B, 4H) value live in vregs.
    xproj_ref[...] = (
        jnp.dot(xflat_ref[...], wih0_ref[...],
                preferred_element_type=jnp.float32)
        + b0_ref[...])

    whh0 = whh0_ref[...]
    wih1 = wih1_ref[...]
    whh1 = whh1_ref[...]

    # ---- Hoisted broadcasts (JAX does not CSE broadcast_in_dim in loops).
    b1 = jnp.broadcast_to(b1_ref[...], (B, 4 * H))
    # 2.0 on the g-gate lanes, 1.0 on i/f/o lanes: one sigmoid pass covers all
    # four gates because tanh(x) = 2*sigmoid(2x) - 1.
    gate_scale = jnp.broadcast_to(
        jnp.concatenate([jnp.ones((1, 2 * H), jnp.float32),
                         jnp.full((1, H), 2.0, jnp.float32),
                         jnp.ones((1, H), jnp.float32)], axis=1),
        (B, 4 * H))

    def cell(gates, c):
        # Single EUP pass over the full (B, 4H) tile; tanh recovery on VPU.
        s = jax.nn.sigmoid(gates * gate_scale)
        i_g = s[:, 0 * H:1 * H]
        f_g = s[:, 1 * H:2 * H]
        g_g = 2.0 * s[:, 2 * H:3 * H] - 1.0
        o_g = s[:, 3 * H:4 * H]
        c_new = f_g * c + i_g * g_g
        h_new = o_g * jnp.tanh(c_new)
        return h_new, c_new

    def step(t, carry):
        h0, c0, h1, c1 = carry
        off = t * B
        if not isinstance(off, int):               # dynamic index (fori path)
            off = pl.multiple_of(off, 8)
        # Layer 0: precomputed input projection + one recurrent matmul.
        g0 = xproj_ref[pl.ds(off, B), :] + jnp.dot(
            h0.astype(jnp.bfloat16), whh0, preferred_element_type=jnp.float32)
        h0, c0 = cell(g0, c0)
        # Layer 1: two accumulated 128-wide matmuls — no per-step lane concat.
        g1 = (jnp.dot(h0.astype(jnp.bfloat16), wih1,
                      preferred_element_type=jnp.float32)
              + jnp.dot(h1.astype(jnp.bfloat16), whh1,
                        preferred_element_type=jnp.float32)
              + b1)
        h1, c1 = cell(g1, c1)
        return h0, c0, h1, c1

    zeros = jnp.zeros((B, H), jnp.float32)
    carry = (zeros, zeros, zeros, zeros)
    if T <= 16:
        # Small static T: full unroll so the LLO scheduler can overlap
        # layer-0 step t+1 with layer-1 step t.
        for t in range(T):
            carry = step(t, carry)
    else:
        # Realistic T: rolled loop keeps vreg live ranges / code size flat.
        carry = jax.lax.fori_loop(0, T, step, carry, unroll=8)
    _, _, h1, _ = carry

    # ---- fc on out[:, -1, :]: VPU multiply + lane reduction (no N=1 matmul).
    out_ref[...] = (jnp.sum(h1 * wfc_ref[...], axis=-1, keepdims=True)
                    + bfc_ref[...])


def stock_lstm_forward(x, params):
    """x: (B, T, F) float32 -> (B, 1) float32."""
    B, T, F = x.shape
    H = params["whh0_t"].shape[0]

    # Pad batch to a multiple of the 8-row sublane so every vreg row is used.
    B_pad = max(8, -(-B // 8) * 8)
    if B_pad != B:
        x = jnp.pad(x, ((0, B_pad - B), (0, 0), (0, 0)))

    # (B, T, F) -> (T, B, F) -> (T*B, F): the layer-0 input projection becomes
    # a single MXU matmul inside the kernel.  bf16 operands; f32 accumulation.
    x_flat = (jnp.transpose(x, (1, 0, 2))
              .reshape(T * B_pad, F)
              .astype(jnp.bfloat16))

    bf16 = jnp.bfloat16
    args = (x_flat,
            params["wih0_t"].astype(bf16), params["whh0_t"].astype(bf16),
            params["b0"],
            params["wih1_t"].astype(bf16), params["whh1_t"].astype(bf16),
            params["b1"],
            params["wfc"], params["bfc"])

    # Total resident data << VMEM on every generation: whole-array, grid-less.
    vmem = pl.BlockSpec(memory_space=pltpu.MemorySpace.VMEM)
    out = pl.pallas_call(
        _lstm_kernel,
        out_shape=jax.ShapeDtypeStruct((B_pad, 1), jnp.float32),
        in_specs=[vmem] * len(args),
        out_specs=vmem,
        scratch_shapes=[pltpu.VMEM((T * B_pad, 4 * H), jnp.float32)],
    )(*args)
    return out[:B]


def _make_params(key, input_size, hidden_size):
    """Deterministic synthetic parameters mirroring nn.LSTM/nn.Linear shapes."""
    H, F = hidden_size, input_size
    ks = jax.random.split(key, 10)
    s = 1.0 / jnp.sqrt(jnp.float32(H))

    def u(k, shape):
        return jax.random.uniform(k, shape, jnp.float32, -s, s)

    # PyTorch shapes: W_ih_l0 (4H, F), W_hh_l* (4H, H), biases (4H,)
    w_ih0 = u(ks[0], (4 * H, F))
    w_hh0 = u(ks[1], (4 * H, H))
    b_ih0 = u(ks[2], (4 * H,))
    b_hh0 = u(ks[3], (4 * H,))
    w_ih1 = u(ks[4], (4 * H, H))
    w_hh1 = u(ks[5], (4 * H, H))
    b_ih1 = u(ks[6], (4 * H,))
    b_hh1 = u(ks[7], (4 * H,))
    w_fc = u(ks[8], (1, H))
    b_fc = u(ks[9], (1,))

    return {
        "wih0_t": w_ih0.T,                          # (F, 4H)
        "whh0_t": w_hh0.T,                          # (H, 4H)
        "b0": (b_ih0 + b_hh0).reshape(1, 4 * H),
        "wih1_t": w_ih1.T,                          # (H, 4H)
        "whh1_t": w_hh1.T,                          # (H, 4H)
        "b1": (b_ih1 + b_hh1).reshape(1, 4 * H),
        "wfc": w_fc,                                # (1, H)
        "bfc": b_fc.reshape(1, 1),
    }


def _reference_forward(x, params):
    """Pure-JAX f32 reference with the original module's semantics."""
    B, T, F = x.shape
    H = params["whh0_t"].shape[0]

    def cell(x_t, h, c, wih, whh, b):
        g = x_t @ wih + h @ whh + b
        i = jax.nn.sigmoid(g[:, 0 * H:1 * H])
        f = jax.nn.sigmoid(g[:, 1 * H:2 * H])
        gg = jnp.tanh(g[:, 2 * H:3 * H])
        o = jax.nn.sigmoid(g[:, 3 * H:4 * H])
        c = f * c + i * gg
        h = o * jnp.tanh(c)
        return h, c

    h = jnp.zeros((B, H), jnp.float32)
    c = jnp.zeros((B, H), jnp.float32)
    seq = []
    for t in range(T):
        h, c = cell(x[:, t, :], h, c, params["wih0_t"], params["whh0_t"],
                    params["b0"])
        seq.append(h)
    h = jnp.zeros((B, H), jnp.float32)
    c = jnp.zeros((B, H), jnp.float32)
    for t in range(T):
        h, c = cell(seq[t], h, c, params["wih1_t"], params["whh1_t"],
                    params["b1"])
    return h @ params["wfc"].T + params["bfc"]


if __name__ == "__main__":
    # Small shapes consistent with the module's forward:
    # batch=2, seq_len=8, input_size=4, hidden_size=32, num_layers=2.
    B, T, F, H = 2, 8, 4, 32
    key = jax.random.PRNGKey(0)
    k_param, k_x = jax.random.split(key)

    params = _make_params(k_param, input_size=F, hidden_size=H)
    x = jax.random.normal(k_x, (B, T, F), jnp.float32)

    out = stock_lstm_forward(x, params)
    jax.block_until_ready(out)
    assert out.shape == (B, 1), out.shape

    ref = _reference_forward(x, params)
    # Tolerance loosened vs the pure-f32 revision because the kernel feeds the
    # MXU bf16 operands (f32 accumulation, f32 elementwise state) per the
    # performance review; expected deviation is O(1e-2) at these shapes.
    assert jnp.allclose(out, ref, rtol=5e-2, atol=5e-2), (out, ref)

    # TODO(synk): mlflow.set_tracking_uri in __init__ is a tracking side
    # effect, not compute — intentionally omitted.
    print("KERNEL_OK")
</pallas_src>

<mosaic_0001>
module attributes {stable_mosaic.version = 11 : i64} {
  func.func @_lstm_kernel(%arg0: memref<64x4xbf16, #tpu.memory_space<vmem>>, %arg1: memref<4x128xbf16, #tpu.memory_space<vmem>>, %arg2: memref<32x128xbf16, #tpu.memory_space<vmem>>, %arg3: memref<1x128xf32, #tpu.memory_space<vmem>>, %arg4: memref<32x128xbf16, #tpu.memory_space<vmem>>, %arg5: memref<32x128xbf16, #tpu.memory_space<vmem>>, %arg6: memref<1x128xf32, #tpu.memory_space<vmem>>, %arg7: memref<1x32xf32, #tpu.memory_space<vmem>>, %arg8: memref<1x1xf32, #tpu.memory_space<vmem>>, %arg9: memref<8x1xf32, #tpu.memory_space<vmem>>, %arg10: memref<64x128xf32, #tpu.memory_space<vmem>>) attributes {dimension_semantics = [], scalar_prefetch = 0 : i64, scratch_operands = 1 : i64, tpu.core_type = #tpu.core_type<tc>} {
    %c0 = arith.constant 0 : index
    %c0_0 = arith.constant 0 : index
    %0 = vector.load %arg0[%c0, %c0_0] : memref<64x4xbf16, #tpu.memory_space<vmem>>, vector<64x4xbf16>
    %c0_1 = arith.constant 0 : index
    %c0_2 = arith.constant 0 : index
    %1 = vector.load %arg1[%c0_1, %c0_2] : memref<4x128xbf16, #tpu.memory_space<vmem>>, vector<4x128xbf16>
    %cst = arith.constant dense<0.000000e+00> : vector<64x128xf32>
    %2 = tpu.matmul %0, %1, %cst {dimension_numbers = #tpu.dot_dimension_numbers<[1], [0], [0], [1], [0, 0, 1, 1], [], []>} : vector<64x4xbf16>, vector<4x128xbf16>, vector<64x128xf32> -> vector<64x128xf32>
    %c0_3 = arith.constant 0 : index
    %c0_4 = arith.constant 0 : index
    %3 = vector.load %arg3[%c0_3, %c0_4] : memref<1x128xf32, #tpu.memory_space<vmem>>, vector<1x128xf32>
    %4 = vector.broadcast %3 : vector<1x128xf32> to vector<64x128xf32>
    %5 = arith.addf %2, %4 : vector<64x128xf32>
    %c0_5 = arith.constant 0 : index
    %c0_6 = arith.constant 0 : index
    %6 = vector.load %arg10[%c0_5, %c0_6] : memref<64x128xf32, #tpu.memory_space<vmem>>, vector<64x128xf32>
    tpu.vector_store %arg10[%c0_5, %c0_6], %5 {strides = array<i32>} : memref<64x128xf32, #tpu.memory_space<vmem>>, vector<64x128xf32>,
    %c0_7 = arith.constant 0 : index
    %c0_8 = arith.constant 0 : index
    %7 = vector.load %arg2[%c0_7, %c0_8] : memref<32x128xbf16, #tpu.memory_space<vmem>>, vector<32x128xbf16>
    %c0_9 = arith.constant 0 : index
    %c0_10 = arith.constant 0 : index
    %8 = vector.load %arg4[%c0_9, %c0_10] : memref<32x128xbf16, #tpu.memory_space<vmem>>, vector<32x128xbf16>
    %c0_11 = arith.constant 0 : index
    %c0_12 = arith.constant 0 : index
    %9 = vector.load %arg5[%c0_11, %c0_12] : memref<32x128xbf16, #tpu.memory_space<vmem>>, vector<32x128xbf16>
    %c0_13 = arith.constant 0 : index
    %c0_14 = arith.constant 0 : index
    %10 = vector.load %arg6[%c0_13, %c0_14] : memref<1x128xf32, #tpu.memory_space<vmem>>, vector<1x128xf32>
    %11 = vector.shape_cast %10 : vector<1x128xf32> to vector<1x128xf32>
    %12 = vector.broadcast %11 : vector<1x128xf32> to vector<8x128xf32>
    %cst_15 = arith.constant 1.000000e+00 : f32
    %13 = vector.broadcast %cst_15 : f32 to vector<1x64xf32>
    %cst_16 = arith.constant 2.000000e+00 : f32
    %14 = vector.broadcast %cst_16 : f32 to vector<1x32xf32>
    %cst_17 = arith.constant 1.000000e+00 : f32
    %15 = vector.broadcast %cst_17 : f32 to vector<1x32xf32>
    %16 = tpu.concatenate %13, %14, %15 in 1 : vector<1x64xf32>, vector<1x32xf32>, vector<1x32xf32> -> vector<1x128xf32>
    %17 = vector.shape_cast %16 : vector<1x128xf32> to vector<1x128xf32>
    %18 = vector.broadcast %17 : vector<1x128xf32> to vector<8x128xf32>
    %cst_18 = arith.constant 0.000000e+00 : f32
    %19 = vector.broadcast %cst_18 : f32 to vector<8x32xf32>
    %c0_19 = arith.constant 0 : index
    %c0_20 = arith.constant 0 : index
    %20 = vector.load %arg10[%c0_19, %c0_20] : memref<64x128xf32, #tpu.memory_space<vmem>>, vector<8x128xf32>
    %21 = arith.truncf %19 : vector<8x32xf32> to vector<8x32xbf16>
    %cst_21 = arith.constant dense<0.000000e+00> : vector<8x128xf32>
    %22 = tpu.matmul %21, %7, %cst_21 {dimension_numbers = #tpu.dot_dimension_numbers<[1], [0], [0], [1], [0, 0, 1, 1], [], []>} : vector<8x32xbf16>, vector<32x128xbf16>, vector<8x128xf32> -> vector<8x128xf32>
    %23 = arith.addf %20, %22 : vector<8x128xf32>
    %24 = arith.mulf %23, %18 : vector<8x128xf32>
    %25 = arith.negf %24 : vector<8x128xf32>
    %26 = math.exp %25 : vector<8x128xf32>
    %cst_22 = arith.constant 1.000000e+00 : f32
    %27 = vector.broadcast %cst_22 : f32 to vector<8x128xf32>
    %28 = arith.addf %27, %26 : vector<8x128xf32>
    %29 = arith.divf %27, %28 : vector<8x128xf32>
    %30 = vector.extract_strided_slice %29 {offsets = [0, 0], sizes = [8, 32], strides = [1, 1]} : vector<8x128xf32> to vector<8x32xf32>
    %31 = vector.extract_strided_slice %29 {offsets = [0, 32], sizes = [8, 32], strides = [1, 1]} : vector<8x128xf32> to vector<8x32xf32>
    %32 = vector.extract_strided_slice %29 {offsets = [0, 64], sizes = [8, 32], strides = [1, 1]} : vector<8x128xf32> to vector<8x32xf32>
    %cst_23 = arith.constant 2.000000e+00 : f32
    %33 = vector.broadcast %cst_23 : f32 to vector<8x32xf32>
    %34 = arith.mulf %33, %32 : vector<8x32xf32>
    %cst_24 = arith.constant 1.000000e+00 : f32
    %35 = vector.broadcast %cst_24 : f32 to vector<8x32xf32>
    %36 = arith.subf %34, %35 : vector<8x32xf32>
    %37 = vector.extract_strided_slice %29 {offsets = [0, 96], sizes = [8, 32], strides = [1, 1]} : vector<8x128xf32> to vector<8x32xf32>
    %38 = arith.mulf %31, %19 : vector<8x32xf32>
    %39 = arith.mulf %30, %36 : vector<8x32xf32>
    %40 = arith.addf %38, %39 : vector<8x32xf32>
    %41 = math.tanh %40 : vector<8x32xf32>
    %42 = arith.mulf %37, %41 : vector<8x32xf32>
    %43 = arith.truncf %42 : vector<8x32xf32> to vector<8x32xbf16>
    %cst_25 = arith.constant dense<0.000000e+00> : vector<8x128xf32>
    %44 = tpu.matmul %43, %8, %cst_25 {dimension_numbers = #tpu.dot_dimension_numbers<[1], [0], [0], [1], [0, 0, 1, 1], [], []>} : vector<8x32xbf16>, vector<32x128xbf16>, vector<8x128xf32> -> vector<8x128xf32>
    %45 = arith.truncf %19 : vector<8x32xf32> to vector<8x32xbf16>
    %cst_26 = arith.constant dense<0.000000e+00> : vector<8x128xf32>
    %46 = tpu.matmul %45, %9, %cst_26 {dimension_numbers = #tpu.dot_dimension_numbers<[1], [0], [0], [1], [0, 0, 1, 1], [], []>} : vector<8x32xbf16>, vector<32x128xbf16>, vector<8x128xf32> -> vector<8x128xf32>
    %47 = arith.addf %44, %46 : vector<8x128xf32>
    %48 = arith.addf %47, %12 : vector<8x128xf32>
    %49 = arith.mulf %48, %18 : vector<8x128xf32>
    %50 = arith.negf %49 : vector<8x128xf32>
    %51 = math.exp %50 : vector<8x128xf32>
    %cst_27 = arith.constant 1.000000e+00 : f32
    %52 = vector.broadcast %cst_27 : f32 to vector<8x128xf32>
    %53 = arith.addf %52, %51 : vector<8x128xf32>
    %54 = arith.divf %52, %53 : vector<8x128xf32>
    %55 = vector.extract_strided_slice %54 {offsets = [0, 0], sizes = [8, 32], strides = [1, 1]} : vector<8x128xf32> to vector<8x32xf32>
    %56 = vector.extract_strided_slice %54 {offsets = [0, 32], sizes = [8, 32], strides = [1, 1]} : vector<8x128xf32> to vector<8x32xf32>
    %57 = vector.extract_strided_slice %54 {offsets = [0, 64], sizes = [8, 32], strides = [1, 1]} : vector<8x128xf32> to vector<8x32xf32>
    %cst_28 = arith.constant 2.000000e+00 : f32
    %58 = vector.broadcast %cst_28 : f32 to vector<8x32xf32>
    %59 = arith.mulf %58, %57 : vector<8x32xf32>
    %cst_29 = arith.constant 1.000000e+00 : f32
    %60 = vector.broadcast %cst_29 : f32 to vector<8x32xf32>
    %61 = arith.subf %59, %60 : vector<8x32xf32>
    %62 = vector.extract_strided_slice %54 {offsets = [0, 96], sizes = [8, 32], strides = [1, 1]} : vector<8x128xf32> to vector<8x32xf32>
    %63 = arith.mulf %56, %19 : vector<8x32xf32>
    %64 = arith.mulf %55, %61 : vector<8x32xf32>
    %65 = arith.addf %63, %64 : vector<8x32xf32>
    %66 = math.tanh %65 : vector<8x32xf32>
    %67 = arith.mulf %62, %66 : vector<8x32xf32>
    %c8 = arith.constant 8 : index
    %c0_30 = arith.constant 0 : index
    %68 = vector.load %arg10[%c8, %c0_30] : memref<64x128xf32, #tpu.memory_space<vmem>>, vector<8x128xf32>
    %69 = arith.truncf %42 : vector<8x32xf32> to vector<8x32xbf16>
    %cst_31 = arith.constant dense<0.000000e+00> : vector<8x128xf32>
    %70 = tpu.matmul %69, %7, %cst_31 {dimension_numbers = #tpu.dot_dimension_numbers<[1], [0], [0], [1], [0, 0, 1, 1], [], []>} : vector<8x32xbf16>, vector<32x128xbf16>, vector<8x128xf32> -> vector<8x128xf32>
    %71 = arith.addf %68, %70 : vector<8x128xf32>
    %72 = arith.mulf %71, %18 : vector<8x128xf32>
    %73 = arith.negf %72 : vector<8x128xf32>
    %74 = math.exp %73 : vector<8x128xf32>
    %cst_32 = arith.constant 1.000000e+00 : f32
    %75 = vector.broadcast %cst_32 : f32 to vector<8x128xf32>
    %76 = arith.addf %75, %74 : vector<8x128xf32>
    %77 = arith.divf %75, %76 : vector<8x128xf32>
    %78 = vector.extract_strided_slice %77 {offsets = [0, 0], sizes = [8, 32], strides = [1, 1]} : vector<8x128xf32> to vector<8x32xf32>
    %79 = vector.extract_strided_slice %77 {offsets = [0, 32], sizes = [8, 32], strides = [1, 1]} : vector<8x128xf32> to vector<8x32xf32>
    %80 = vector.extract_strided_slice %77 {offsets = [0, 64], sizes = [8, 32], strides = [1, 1]} : vector<8x128xf32> to vector<8x32xf32>
    %cst_33 = arith.constant 2.000000e+00 : f32
    %81 = vector.broadcast %cst_33 : f32 to vector<8x32xf32>
    %82 = arith.mulf %81, %80 : vector<8x32xf32>
    %cst_34 = arith.constant 1.000000e+00 : f32
    %83 = vector.broadcast %cst_34 : f32 to vector<8x32xf32>
    %84 = arith.subf %82, %83 : vector<8x32xf32>
    %85 = vector.extract_strided_slice %77 {offsets = [0, 96], sizes = [8, 32], strides = [1, 1]} : vector<8x128xf32> to vector<8x32xf32>
    %86 = arith.mulf %79, %40 : vector<8x32xf32>
    %87 = arith.mulf %78, %84 : vector<8x32xf32>
    %88 = arith.addf %86, %87 : vector<8x32xf32>
    %89 = math.tanh %88 : vector<8x32xf32>
    %90 = arith.mulf %85, %89 : vector<8x32xf32>
    %91 = arith.truncf %90 : vector<8x32xf32> to vector<8x32xbf16>
    %cst_35 = arith.constant dense<0.000000e+00> : vector<8x128xf32>
    %92 = tpu.matmul %91, %8, %cst_35 {dimension_numbers = #tpu.dot_dimension_numbers<[1], [0], [0], [1], [0, 0, 1, 1], [], []>} : vector<8x32xbf16>, vector<32x128xbf16>, vector<8x128xf32> -> vector<8x128xf32>
    %93 = arith.truncf %67 : vector<8x32xf32> to vector<8x32xbf16>
    %cst_36 = arith.constant dense<0.000000e+00> : vector<8x128xf32>
    %94 = tpu.matmul %93, %9, %cst_36 {dimension_numbers = #tpu.dot_dimension_numbers<[1], [0], [0], [1], [0, 0, 1, 1], [], []>} : vector<8x32xbf16>, vector<32x128xbf16>, vector<8x128xf32> -> vector<8x128xf32>
    %95 = arith.addf %92, %94 : vector<8x128xf32>
    %96 = arith.addf %95, %12 : vector<8x128xf32>
    %97 = arith.mulf %96, %18 : vector<8x128xf32>
    %98 = arith.negf %97 : vector<8x128xf32>
    %99 = math.exp %98 : vector<8x128xf32>
    %cst_37 = arith.constant 1.000000e+00 : f32
    %100 = vector.broadcast %cst_37 : f32 to vector<8x128xf32>
    %101 = arith.addf %100, %99 : vector<8x128xf32>
    %102 = arith.divf %100, %101 : vector<8x128xf32>
    %103 = vector.extract_strided_slice %102 {offsets = [0, 0], sizes = [8, 32], strides = [1, 1]} : vector<8x128xf32> to vector<8x32xf32>
    %104 = vector.extract_strided_slice %102 {offsets = [0, 32], sizes = [8, 32], strides = [1, 1]} : vector<8x128xf32> to vector<8x32xf32>
    %105 = vector.extract_strided_slice %102 {offsets = [0, 64], sizes = [8, 32], strides = [1, 1]} : vector<8x128xf32> to vector<8x32xf32>
    %cst_38 = arith.constant 2.000000e+00 : f32
    %106 = vector.broadcast %cst_38 : f32 to vector<8x32xf32>
    %107 = arith.mulf %106, %105 : vector<8x32xf32>
    %cst_39 = arith.constant 1.000000e+00 : f32
    %108 = vector.broadcast %cst_39 : f32 to vector<8x32xf32>
    %109 = arith.subf %107, %108 : vector<8x32xf32>
    %110 = vector.extract_strided_slice %102 {offsets = [0, 96], sizes = [8, 32], strides = [1, 1]} : vector<8x128xf32> to vector<8x32xf32>
    %111 = arith.mulf %104, %65 : vector<8x32xf32>
    %112 = arith.mulf %103, %109 : vector<8x32xf32>
    %113 = arith.addf %111, %112 : vector<8x32xf32>
    %114 = math.tanh %113 : vector<8x32xf32>
    %115 = arith.mulf %110, %114 : vector<8x32xf32>
    %c16 = arith.constant 16 : index
    %c0_40 = arith.constant 0 : index
    %116 = vector.load %arg10[%c16, %c0_40] : memref<64x128xf32, #tpu.memory_space<vmem>>, vector<8x128xf32>
    %117 = arith.truncf %90 : vector<8x32xf32> to vector<8x32xbf16>
    %cst_41 = arith.constant dense<0.000000e+00> : vector<8x128xf32>
    %118 = tpu.matmul %117, %7, %cst_41 {dimension_numbers = #tpu.dot_dimension_numbers<[1], [0], [0], [1], [0, 0, 1, 1], [], []>} : vector<8x32xbf16>, vector<32x128xbf16>, vector<8x128xf32> -> vector<8x128xf32>
    %119 = arith.addf %116, %118 : vector<8x128xf32>
    %120 = arith.mulf %119, %18 : vector<8x128xf32>
    %121 = arith.negf %120 : vector<8x128xf32>
    %122 = math.exp %121 : vector<8x128xf32>
    %cst_42 = arith.constant 1.000000e+00 : f32
    %123 = vector.broadcast %cst_42 : f32 to vector<8x128xf32>
    %124 = arith.addf %123, %122 : vector<8x128xf32>
    %125 = arith.divf %123, %124 : vector<8x128xf32>
    %126 = vector.extract_strided_slice %125 {offsets = [0, 0], sizes = [8, 32], strides = [1, 1]} : vector<8x128xf32> to vector<8x32xf32>
    %127 = vector.extract_strided_slice %125 {offsets = [0, 32], sizes = [8, 32], strides = [1, 1]} : vector<8x128xf32> to vector<8x32xf32>
    %128 = vector.extract_strided_slice %125 {offsets = [0, 64], sizes = [8, 32], strides = [1, 1]} : vector<8x128xf32> to vector<8x32xf32>
    %cst_43 = arith.constant 2.000000e+00 : f32
    %129 = vector.broadcast %cst_43 : f32 to vector<8x32xf32>
    %130 = arith.mulf %129, %128 : vector<8x32xf32>
    %cst_44 = arith.constant 1.000000e+00 : f32
    %131 = vector.broadcast %cst_44 : f32 to vector<8x32xf32>
    %132 = arith.subf %130, %131 : vector<8x32xf32>
    %133 = vector.extract_strided_slice %125 {offsets = [0, 96], sizes = [8, 32], strides = [1, 1]} : vector<8x128xf32> to vector<8x32xf32>
    %134 = arith.mulf %127, %88 : vector<8x32xf32>
    %135 = arith.mulf %126, %132 : vector<8x32xf32>
    %136 = arith.addf %134, %135 : vector<8x32xf32>
    %137 = math.tanh %136 : vector<8x32xf32>
    %138 = arith.mulf %133, %137 : vector<8x32xf32>
    %139 = arith.truncf %138 : vector<8x32xf32> to vector<8x32xbf16>
    %cst_45 = arith.constant dense<0.000000e+00> : vector<8x128xf32>
    %140 = tpu.matmul %139, %8, %cst_45 {dimension_numbers = #tpu.dot_dimension_numbers<[1], [0], [0], [1], [0, 0, 1, 1], [], []>} : vector<8x32xbf16>, vector<32x128xbf16>, vector<8x128xf32> -> vector<8x128xf32>
    %141 = arith.truncf %115 : vector<8x32xf32> to vector<8x32xbf16>
    %cst_46 = arith.constant dense<0.000000e+00> : vector<8x128xf32>
    %142 = tpu.matmul %141, %9, %cst_46 {dimension_numbers = #tpu.dot_dimension_numbers<[1], [0], [0], [1], [0, 0, 1, 1], [], []>} : vector<8x32xbf16>, vector<32x128xbf16>, vector<8x128xf32> -> vector<8x128xf32>
    %143 = arith.addf %140, %142 : vector<8x128xf32>
    %144 = arith.addf %143, %12 : vector<8x128xf32>
    %145 = arith.mulf %144, %18 : vector<8x128xf32>
    %146 = arith.negf %145 : vector<8x128xf32>
    %147 = math.exp %146 : vector<8x128xf32>
    %cst_47 = arith.constant 1.000000e+00 : f32
    %148 = vector.broadcast %cst_47 : f32 to vector<8x128xf32>
    %149 = arith.addf %148, %147 : vector<8x128xf32>
    %150 = arith.divf %148, %149 : vector<8x128xf32>
    %151 = vector.extract_strided_slice %150 {offsets = [0, 0], sizes = [8, 32], strides = [1, 1]} : vector<8x128xf32> to vector<8x32xf32>
    %152 = vector.extract_strided_slice %150 {offsets = [0, 32], sizes = [8, 32], strides = [1, 1]} : vector<8x128xf32> to vector<8x32xf32>
    %153 = vector.extract_strided_slice %150 {offsets = [0, 64], sizes = [8, 32], strides = [1, 1]} : vector<8x128xf32> to vector<8x32xf32>
    %cst_48 = arith.constant 2.000000e+00 : f32
    %154 = vector.broadcast %cst_48 : f32 to vector<8x32xf32>
    %155 = arith.mulf %154, %153 : vector<8x32xf32>
    %cst_49 = arith.constant 1.000000e+00 : f32
    %156 = vector.broadcast %cst_49 : f32 to vector<8x32xf32>
    %157 = arith.subf %155, %156 : vector<8x32xf32>
    %158 = vector.extract_strided_slice %150 {offsets = [0, 96], sizes = [8, 32], strides = [1, 1]} : vector<8x128xf32> to vector<8x32xf32>
    %159 = arith.mulf %152, %113 : vector<8x32xf32>
    %160 = arith.mulf %151, %157 : vector<8x32xf32>
    %161 = arith.addf %159, %160 : vector<8x32xf32>
    %162 = math.tanh %161 : vector<8x32xf32>
    %163 = arith.mulf %158, %162 : vector<8x32xf32>
    %c24 = arith.constant 24 : index
    %c0_50 = arith.constant 0 : index
    %164 = vector.load %arg10[%c24, %c0_50] : memref<64x128xf32, #tpu.memory_space<vmem>>, vector<8x128xf32>
    %165 = arith.truncf %138 : vector<8x32xf32> to vector<8x32xbf16>
    %cst_51 = arith.constant dense<0.000000e+00> : vector<8x128xf32>
    %166 = tpu.matmul %165, %7, %cst_51 {dimension_numbers = #tpu.dot_dimension_numbers<[1], [0], [0], [1], [0, 0, 1, 1], [], []>} : vector<8x32xbf16>, vector<32x128xbf16>, vector<8x128xf32> -> vector<8x128xf32>
    %167 = arith.addf %164, %166 : vector<8x128xf32>
    %168 = arith.mulf %167, %18 : vector<8x128xf32>
    %169 = arith.negf %168 : vector<8x128xf32>
    %170 = math.exp %169 : vector<8x128xf32>
    %cst_52 = arith.constant 1.000000e+00 : f32
    %171 = vector.broadcast %cst_52 : f32 to vector<8x128xf32>
    %172 = arith.addf %171, %170 : vector<8x128xf32>
    %173 = arith.divf %171, %172 : vector<8x128xf32>
    %174 = vector.extract_strided_slice %173 {offsets = [0, 0], sizes = [8, 32], strides = [1, 1]} : vector<8x128xf32> to vector<8x32xf32>
    %175 = vector.extract_strided_slice %173 {offsets = [0, 32], sizes = [8, 32], strides = [1, 1]} : vector<8x128xf32> to vector<8x32xf32>
    %176 = vector.extract_strided_slice %173 {offsets = [0, 64], sizes = [8, 32], strides = [1, 1]} : vector<8x128xf32> to vector<8x32xf32>
    %cst_53 = arith.constant 2.000000e+00 : f32
    %177 = vector.broadcast %cst_53 : f32 to vector<8x32xf32>
    %178 = arith.mulf %177, %176 : vector<8x32xf32>
    %cst_54 = arith.constant 1.000000e+00 : f32
    %179 = vector.broadcast %cst_54 : f32 to vector<8x32xf32>
    %180 = arith.subf %178, %179 : vector<8x32xf32>
    %181 = vector.extract_strided_slice %173 {offsets = [0, 96], sizes = [8, 32], strides = [1, 1]} : vector<8x128xf32> to vector<8x32xf32>
    %182 = arith.mulf %175, %136 : vector<8x32xf32>
    %183 = arith.mulf %174, %180 : vector<8x32xf32>
    %184 = arith.addf %182, %183 : vector<8x32xf32>
    %185 = math.tanh %184 : vector<8x32xf32>
    %186 = arith.mulf %181, %185 : vector<8x32xf32>
    %187 = arith.truncf %186 : vector<8x32xf32> to vector<8x32xbf16>
    %cst_55 = arith.constant dense<0.000000e+00> : vector<8x128xf32>
    %188 = tpu.matmul %187, %8, %cst_55 {dimension_numbers = #tpu.dot_dimension_numbers<[1], [0], [0], [1], [0, 0, 1, 1], [], []>} : vector<8x32xbf16>, vector<32x128xbf16>, vector<8x128xf32> -> vector<8x128xf32>
    %189 = arith.truncf %163 : vector<8x32xf32> to vector<8x32xbf16>
    %cst_56 = arith.constant dense<0.000000e+00> : vector<8x128xf32>
    %190 = tpu.matmul %189, %9, %cst_56 {dimension_numbers = #tpu.dot_dimension_numbers<[1], [0], [0], [1], [0, 0, 1, 1], [], []>} : vector<8x32xbf16>, vector<32x128xbf16>, vector<8x128xf32> -> vector<8x128xf32>
    %191 = arith.addf %188, %190 : vector<8x128xf32>
    %192 = arith.addf %191, %12 : vector<8x128xf32>
    %193 = arith.mulf %192, %18 : vector<8x128xf32>
    %194 = arith.negf %193 : vector<8x128xf32>
    %195 = math.exp %194 : vector<8x128xf32>
    %cst_57 = arith.constant 1.000000e+00 : f32
    %196 = vector.broadcast %cst_57 : f32 to vector<8x128xf32>
    %197 = arith.addf %196, %195 : vector<8x128xf32>
    %198 = arith.divf %196, %197 : vector<8x128xf32>
    %199 = vector.extract_strided_slice %198 {offsets = [0, 0], sizes = [8, 32], strides = [1, 1]} : vector<8x128xf32> to vector<8x32xf32>
    %200 = vector.extract_strided_slice %198 {offsets = [0, 32], sizes = [8, 32], strides = [1, 1]} : vector<8x128xf32> to vector<8x32xf32>
    %201 = vector.extract_strided_slice %198 {offsets = [0, 64], sizes = [8, 32], strides = [1, 1]} : vector<8x128xf32> to vector<8x32xf32>
    %cst_58 = arith.constant 2.000000e+00 : f32
    %202 = vector.broadcast %cst_58 : f32 to vector<8x32xf32>
    %203 = arith.mulf %202, %201 : vector<8x32xf32>
    %cst_59 = arith.constant 1.000000e+00 : f32
    %204 = vector.broadcast %cst_59 : f32 to vector<8x32xf32>
    %205 = arith.subf %203, %204 : vector<8x32xf32>
    %206 = vector.extract_strided_slice %198 {offsets = [0, 96], sizes = [8, 32], strides = [1, 1]} : vector<8x128xf32> to vector<8x32xf32>
    %207 = arith.mulf %200, %161 : vector<8x32xf32>
    %208 = arith.mulf %199, %205 : vector<8x32xf32>
    %209 = arith.addf %207, %208 : vector<8x32xf32>
    %210 = math.tanh %209 : vector<8x32xf32>
    %211 = arith.mulf %206, %210 : vector<8x32xf32>
    %c32 = arith.constant 32 : index
    %c0_60 = arith.constant 0 : index
    %212 = vector.load %arg10[%c32, %c0_60] : memref<64x128xf32, #tpu.memory_space<vmem>>, vector<8x128xf32>
    %213 = arith.truncf %186 : vector<8x32xf32> to vector<8x32xbf16>
    %cst_61 = arith.constant dense<0.000000e+00> : vector<8x128xf32>
    %214 = tpu.matmul %213, %7, %cst_61 {dimension_numbers = #tpu.dot_dimension_numbers<[1], [0], [0], [1], [0, 0, 1, 1], [], []>} : vector<8x32xbf16>, vector<32x128xbf16>, vector<8x128xf32> -> vector<8x128xf32>
    %215 = arith.addf %212, %214 : vector<8x128xf32>
    %216 = arith.mulf %215, %18 : vector<8x128xf32>
    %217 = arith.negf %216 : vector<8x128xf32>
    %218 = math.exp %217 : vector<8x128xf32>
    %cst_62 = arith.constant 1.000000e+00 : f32
    %219 = vector.broadcast %cst_62 : f32 to vector<8x128xf32>
    %220 = arith.addf %219, %218 : vector<8x128xf32>
    %221 = arith.divf %219, %220 : vector<8x128xf32>
    %222 = vector.extract_strided_slice %221 {offsets = [0, 0], sizes = [8, 32], strides = [1, 1]} : vector<8x128xf32> to vector<8x32xf32>
    %223 = vector.extract_strided_slice %221 {offsets = [0, 32], sizes = [8, 32], strides = [1, 1]} : vector<8x128xf32> to vector<8x32xf32>
    %224 = vector.extract_strided_slice %221 {offsets = [0, 64], sizes = [8, 32], strides = [1, 1]} : vector<8x128xf32> to vector<8x32xf32>
    %cst_63 = arith.constant 2.000000e+00 : f32
    %225 = vector.broadcast %cst_63 : f32 to vector<8x32xf32>
    %226 = arith.mulf %225, %224 : vector<8x32xf32>
    %cst_64 = arith.constant 1.000000e+00 : f32
    %227 = vector.broadcast %cst_64 : f32 to vector<8x32xf32>
    %228 = arith.subf %226, %227 : vector<8x32xf32>
    %229 = vector.extract_strided_slice %221 {offsets = [0, 96], sizes = [8, 32], strides = [1, 1]} : vector<8x128xf32> to vector<8x32xf32>
    %230 = arith.mulf %223, %184 : vector<8x32xf32>
    %231 = arith.mulf %222, %228 : vector<8x32xf32>
    %232 = arith.addf %230, %231 : vector<8x32xf32>
    %233 = math.tanh %232 : vector<8x32xf32>
    %234 = arith.mulf %229, %233 : vector<8x32xf32>
    %235 = arith.truncf %234 : vector<8x32xf32> to vector<8x32xbf16>
    %cst_65 = arith.constant dense<0.000000e+00> : vector<8x128xf32>
    %236 = tpu.matmul %235, %8, %cst_65 {dimension_numbers = #tpu.dot_dimension_numbers<[1], [0], [0], [1], [0, 0, 1, 1], [], []>} : vector<8x32xbf16>, vector<32x128xbf16>, vector<8x128xf32> -> vector<8x128xf32>
    %237 = arith.truncf %211 : vector<8x32xf32> to vector<8x32xbf16>
    %cst_66 = arith.constant dense<0.000000e+00> : vector<8x128xf32>
    %238 = tpu.matmul %237, %9, %cst_66 {dimension_numbers = #tpu.dot_dimension_numbers<[1], [0], [0], [1], [0, 0, 1, 1], [], []>} : vector<8x32xbf16>, vector<32x128xbf16>, vector<8x128xf32> -> vector<8x128xf32>
    %239 = arith.addf %236, %238 : vector<8x128xf32>
    %240 = arith.addf %239, %12 : vector<8x128xf32>
    %241 = arith.mulf %240, %18 : vector<8x128xf32>
    %242 = arith.negf %241 : vector<8x128xf32>
    %243 = math.exp %242 : vector<8x128xf32>
    %cst_67 = arith.constant 1.000000e+00 : f32
    %244 = vector.broadcast %cst_67 : f32 to vector<8x128xf32>
    %245 = arith.addf %244, %243 : vector<8x128xf32>
    %246 = arith.divf %244, %245 : vector<8x128xf32>
    %247 = vector.extract_strided_slice %246 {offsets = [0, 0], sizes = [8, 32], strides = [1, 1]} : vector<8x128xf32> to vector<8x32xf32>
    %248 = vector.extract_strided_slice %246 {offsets = [0, 32], sizes = [8, 32], strides = [1, 1]} : vector<8x128xf32> to vector<8x32xf32>
    %249 = vector.extract_strided_slice %246 {offsets = [0, 64], sizes = [8, 32], strides = [1, 1]} : vector<8x128xf32> to vector<8x32xf32>
    %cst_68 = arith.constant 2.000000e+00 : f32
    %250 = vector.broadcast %cst_68 : f32 to vector<8x32xf32>
    %251 = arith.mulf %250, %249 : vector<8x32xf32>
    %cst_69 = arith.constant 1.000000e+00 : f32
    %252 = vector.broadcast %cst_69 : f32 to vector<8x32xf32>
    %253 = arith.subf %251, %252 : vector<8x32xf32>
    %254 = vector.extract_strided_slice %246 {offsets = [0, 96], sizes = [8, 32], strides = [1, 1]} : vector<8x128xf32> to vector<8x32xf32>
    %255 = arith.mulf %248, %209 : vector<8x32xf32>
    %256 = arith.mulf %247, %253 : vector<8x32xf32>
    %257 = arith.addf %255, %256 : vector<8x32xf32>
    %258 = math.tanh %257 : vector<8x32xf32>
    %259 = arith.mulf %254, %258 : vector<8x32xf32>
    %c40 = arith.constant 40 : index
    %c0_70 = arith.constant 0 : index
    %260 = vector.load %arg10[%c40, %c0_70] : memref<64x128xf32, #tpu.memory_space<vmem>>, vector<8x128xf32>
    %261 = arith.truncf %234 : vector<8x32xf32> to vector<8x32xbf16>
    %cst_71 = arith.constant dense<0.000000e+00> : vector<8x128xf32>
    %262 = tpu.matmul %261, %7, %cst_71 {dimension_numbers = #tpu.dot_dimension_numbers<[1], [0], [0], [1], [0, 0, 1, 1], [], []>} : vector<8x32xbf16>, vector<32x128xbf16>, vector<8x128xf32> -> vector<8x128xf32>
    %263 = arith.addf %260, %262 : vector<8x128xf32>
    %264 = arith.mulf %263, %18 : vector<8x128xf32>
    %265 = arith.negf %264 : vector<8x128xf32>
    %266 = math.exp %265 : vector<8x128xf32>
    %cst_72 = arith.constant 1.000000e+00 : f32
    %267 = vector.broadcast %cst_72 : f32 to vector<8x128xf32>
    %268 = arith.addf %267, %266 : vector<8x128xf32>
    %269 = arith.divf %267, %268 : vector<8x128xf32>
    %270 = vector.extract_strided_slice %269 {offsets = [0, 0], sizes = [8, 32], strides = [1, 1]} : vector<8x128xf32> to vector<8x32xf32>
    %271 = vector.extract_strided_slice %269 {offsets = [0, 32], sizes = [8, 32], strides = [1, 1]} : vector<8x128xf32> to vector<8x32xf32>
    %272 = vector.extract_strided_slice %269 {offsets = [0, 64], sizes = [8, 32], strides = [1, 1]} : vector<8x128xf32> to vector<8x32xf32>
    %cst_73 = arith.constant 2.000000e+00 : f32
    %273 = vector.broadcast %cst_73 : f32 to vector<8x32xf32>
    %274 = arith.mulf %273, %272 : vector<8x32xf32>
    %cst_74 = arith.constant 1.000000e+00 : f32
    %275 = vector.broadcast %cst_74 : f32 to vector<8x32xf32>
    %276 = arith.subf %274, %275 : vector<8x32xf32>
    %277 = vector.extract_strided_slice %269 {offsets = [0, 96], sizes = [8, 32], strides = [1, 1]} : vector<8x128xf32> to vector<8x32xf32>
    %278 = arith.mulf %271, %232 : vector<8x32xf32>
    %279 = arith.mulf %270, %276 : vector<8x32xf32>
    %280 = arith.addf %278, %279 : vector<8x32xf32>
    %281 = math.tanh %280 : vector<8x32xf32>
    %282 = arith.mulf %277, %281 : vector<8x32xf32>
    %283 = arith.truncf %282 : vector<8x32xf32> to vector<8x32xbf16>
    %cst_75 = arith.constant dense<0.000000e+00> : vector<8x128xf32>
    %284 = tpu.matmul %283, %8, %cst_75 {dimension_numbers = #tpu.dot_dimension_numbers<[1], [0], [0], [1], [0, 0, 1, 1], [], []>} : vector<8x32xbf16>, vector<32x128xbf16>, vector<8x128xf32> -> vector<8x128xf32>
    %285 = arith.truncf %259 : vector<8x32xf32> to vector<8x32xbf16>
    %cst_76 = arith.constant dense<0.000000e+00> : vector<8x128xf32>
    %286 = tpu.matmul %285, %9, %cst_76 {dimension_numbers = #tpu.dot_dimension_numbers<[1], [0], [0], [1], [0, 0, 1, 1], [], []>} : vector<8x32xbf16>, vector<32x128xbf16>, vector<8x128xf32> -> vector<8x128xf32>
    %287 = arith.addf %284, %286 : vector<8x128xf32>
    %288 = arith.addf %287, %12 : vector<8x128xf32>
    %289 = arith.mulf %288, %18 : vector<8x128xf32>
    %290 = arith.negf %289 : vector<8x128xf32>
    %291 = math.exp %290 : vector<8x128xf32>
    %cst_77 = arith.constant 1.000000e+00 : f32
    %292 = vector.broadcast %cst_77 : f32 to vector<8x128xf32>
    %293 = arith.addf %292, %291 : vector<8x128xf32>
    %294 = arith.divf %292, %293 : vector<8x128xf32>
    %295 = vector.extract_strided_slice %294 {offsets = [0, 0], sizes = [8, 32], strides = [1, 1]} : vector<8x128xf32> to vector<8x32xf32>
    %296 = vector.extract_strided_slice %294 {offsets = [0, 32], sizes = [8, 32], strides = [1, 1]} : vector<8x128xf32> to vector<8x32xf32>
    %297 = vector.extract_strided_slice %294 {offsets = [0, 64], sizes = [8, 32], strides = [1, 1]} : vector<8x128xf32> to vector<8x32xf32>
    %cst_78 = arith.constant 2.000000e+00 : f32
    %298 = vector.broadcast %cst_78 : f32 to vector<8x32xf32>
    %299 = arith.mulf %298, %297 : vector<8x32xf32>
    %cst_79 = arith.constant 1.000000e+00 : f32
    %300 = vector.broadcast %cst_79 : f32 to vector<8x32xf32>
    %301 = arith.subf %299, %300 : vector<8x32xf32>
    %302 = vector.extract_strided_slice %294 {offsets = [0, 96], sizes = [8, 32], strides = [1, 1]} : vector<8x128xf32> to vector<8x32xf32>
    %303 = arith.mulf %296, %257 : vector<8x32xf32>
    %304 = arith.mulf %295, %301 : vector<8x32xf32>
    %305 = arith.addf %303, %304 : vector<8x32xf32>
    %306 = math.tanh %305 : vector<8x32xf32>
    %307 = arith.mulf %302, %306 : vector<8x32xf32>
    %c48 = arith.constant 48 : index
    %c0_80 = arith.constant 0 : index
    %308 = vector.load %arg10[%c48, %c0_80] : memref<64x128xf32, #tpu.memory_space<vmem>>, vector<8x128xf32>
    %309 = arith.truncf %282 : vector<8x32xf32> to vector<8x32xbf16>
    %cst_81 = arith.constant dense<0.000000e+00> : vector<8x128xf32>
    %310 = tpu.matmul %309, %7, %cst_81 {dimension_numbers = #tpu.dot_dimension_numbers<[1], [0], [0], [1], [0, 0, 1, 1], [], []>} : vector<8x32xbf16>, vector<32x128xbf16>, vector<8x128xf32> -> vector<8x128xf32>
    %311 = arith.addf %308, %310 : vector<8x128xf32>
    %312 = arith.mulf %311, %18 : vector<8x128xf32>
    %313 = arith.negf %312 : vector<8x128xf32>
    %314 = math.exp %313 : vector<8x128xf32>
    %cst_82 = arith.constant 1.000000e+00 : f32
    %315 = vector.broadcast %cst_82 : f32 to vector<8x128xf32>
    %316 = arith.addf %315, %314 : vector<8x128xf32>
    %317 = arith.divf %315, %316 : vector<8x128xf32>
    %318 = vector.extract_strided_slice %317 {offsets = [0, 0], sizes = [8, 32], strides = [1, 1]} : vector<8x128xf32> to vector<8x32xf32>
    %319 = vector.extract_strided_slice %317 {offsets = [0, 32], sizes = [8, 32], strides = [1, 1]} : vector<8x128xf32> to vector<8x32xf32>
    %320 = vector.extract_strided_slice %317 {offsets = [0, 64], sizes = [8, 32], strides = [1, 1]} : vector<8x128xf32> to vector<8x32xf32>
    %cst_83 = arith.constant 2.000000e+00 : f32
    %321 = vector.broadcast %cst_83 : f32 to vector<8x32xf32>
    %322 = arith.mulf %321, %320 : vector<8x32xf32>
    %cst_84 = arith.constant 1.000000e+00 : f32
    %323 = vector.broadcast %cst_84 : f32 to vector<8x32xf32>
    %324 = arith.subf %322, %323 : vector<8x32xf32>
    %325 = vector.extract_strided_slice %317 {offsets = [0, 96], sizes = [8, 32], strides = [1, 1]} : vector<8x128xf32> to vector<8x32xf32>
    %326 = arith.mulf %319, %280 : vector<8x32xf32>
    %327 = arith.mulf %318, %324 : vector<8x32xf32>
    %328 = arith.addf %326, %327 : vector<8x32xf32>
    %329 = math.tanh %328 : vector<8x32xf32>
    %330 = arith.mulf %325, %329 : vector<8x32xf32>
    %331 = arith.truncf %330 : vector<8x32xf32> to vector<8x32xbf16>
    %cst_85 = arith.constant dense<0.000000e+00> : vector<8x128xf32>
    %332 = tpu.matmul %331, %8, %cst_85 {dimension_numbers = #tpu.dot_dimension_numbers<[1], [0], [0], [1], [0, 0, 1, 1], [], []>} : vector<8x32xbf16>, vector<32x128xbf16>, vector<8x128xf32> -> vector<8x128xf32>
    %333 = arith.truncf %307 : vector<8x32xf32> to vector<8x32xbf16>
    %cst_86 = arith.constant dense<0.000000e+00> : vector<8x128xf32>
    %334 = tpu.matmul %333, %9, %cst_86 {dimension_numbers = #tpu.dot_dimension_numbers<[1], [0], [0], [1], [0, 0, 1, 1], [], []>} : vector<8x32xbf16>, vector<32x128xbf16>, vector<8x128xf32> -> vector<8x128xf32>
    %335 = arith.addf %332, %334 : vector<8x128xf32>
    %336 = arith.addf %335, %12 : vector<8x128xf32>
    %337 = arith.mulf %336, %18 : vector<8x128xf32>
    %338 = arith.negf %337 : vector<8x128xf32>
    %339 = math.exp %338 : vector<8x128xf32>
    %cst_87 = arith.constant 1.000000e+00 : f32
    %340 = vector.broadcast %cst_87 : f32 to vector<8x128xf32>
    %341 = arith.addf %340, %339 : vector<8x128xf32>
    %342 = arith.divf %340, %341 : vector<8x128xf32>
    %343 = vector.extract_strided_slice %342 {offsets = [0, 0], sizes = [8, 32], strides = [1, 1]} : vector<8x128xf32> to vector<8x32xf32>
    %344 = vector.extract_strided_slice %342 {offsets = [0, 32], sizes = [8, 32], strides = [1, 1]} : vector<8x128xf32> to vector<8x32xf32>
    %345 = vector.extract_strided_slice %342 {offsets = [0, 64], sizes = [8, 32], strides = [1, 1]} : vector<8x128xf32> to vector<8x32xf32>
    %cst_88 = arith.constant 2.000000e+00 : f32
    %346 = vector.broadcast %cst_88 : f32 to vector<8x32xf32>
    %347 = arith.mulf %346, %345 : vector<8x32xf32>
    %cst_89 = arith.constant 1.000000e+00 : f32
    %348 = vector.broadcast %cst_89 : f32 to vector<8x32xf32>
    %349 = arith.subf %347, %348 : vector<8x32xf32>
    %350 = vector.extract_strided_slice %342 {offsets = [0, 96], sizes = [8, 32], strides = [1, 1]} : vector<8x128xf32> to vector<8x32xf32>
    %351 = arith.mulf %344, %305 : vector<8x32xf32>
    %352 = arith.mulf %343, %349 : vector<8x32xf32>
    %353 = arith.addf %351, %352 : vector<8x32xf32>
    %354 = math.tanh %353 : vector<8x32xf32>
    %355 = arith.mulf %350, %354 : vector<8x32xf32>
    %c56 = arith.constant 56 : index
    %c0_90 = arith.constant 0 : index
    %356 = vector.load %arg10[%c56, %c0_90] : memref<64x128xf32, #tpu.memory_space<vmem>>, vector<8x128xf32>
    %357 = arith.truncf %330 : vector<8x32xf32> to vector<8x32xbf16>
    %cst_91 = arith.constant dense<0.000000e+00> : vector<8x128xf32>
    %358 = tpu.matmul %357, %7, %cst_91 {dimension_numbers = #tpu.dot_dimension_numbers<[1], [0], [0], [1], [0, 0, 1, 1], [], []>} : vector<8x32xbf16>, vector<32x128xbf16>, vector<8x128xf32> -> vector<8x128xf32>
    %359 = arith.addf %356, %358 : vector<8x128xf32>
    %360 = arith.mulf %359, %18 : vector<8x128xf32>
    %361 = arith.negf %360 : vector<8x128xf32>
    %362 = math.exp %361 : vector<8x128xf32>
    %cst_92 = arith.constant 1.000000e+00 : f32
    %363 = vector.broadcast %cst_92 : f32 to vector<8x128xf32>
    %364 = arith.addf %363, %362 : vector<8x128xf32>
    %365 = arith.divf %363, %364 : vector<8x128xf32>
    %366 = vector.extract_strided_slice %365 {offsets = [0, 0], sizes = [8, 32], strides = [1, 1]} : vector<8x128xf32> to vector<8x32xf32>
    %367 = vector.extract_strided_slice %365 {offsets = [0, 32], sizes = [8, 32], strides = [1, 1]} : vector<8x128xf32> to vector<8x32xf32>
    %368 = vector.extract_strided_slice %365 {offsets = [0, 64], sizes = [8, 32], strides = [1, 1]} : vector<8x128xf32> to vector<8x32xf32>
    %cst_93 = arith.constant 2.000000e+00 : f32
    %369 = vector.broadcast %cst_93 : f32 to vector<8x32xf32>
    %370 = arith.mulf %369, %368 : vector<8x32xf32>
    %cst_94 = arith.constant 1.000000e+00 : f32
    %371 = vector.broadcast %cst_94 : f32 to vector<8x32xf32>
    %372 = arith.subf %370, %371 : vector<8x32xf32>
    %373 = vector.extract_strided_slice %365 {offsets = [0, 96], sizes = [8, 32], strides = [1, 1]} : vector<8x128xf32> to vector<8x32xf32>
    %374 = arith.mulf %367, %328 : vector<8x32xf32>
    %375 = arith.mulf %366, %372 : vector<8x32xf32>
    %376 = arith.addf %374, %375 : vector<8x32xf32>
    %377 = math.tanh %376 : vector<8x32xf32>
    %378 = arith.mulf %373, %377 : vector<8x32xf32>
    %379 = arith.truncf %378 : vector<8x32xf32> to vector<8x32xbf16>
    %cst_95 = arith.constant dense<0.000000e+00> : vector<8x128xf32>
    %380 = tpu.matmul %379, %8, %cst_95 {dimension_numbers = #tpu.dot_dimension_numbers<[1], [0], [0], [1], [0, 0, 1, 1], [], []>} : vector<8x32xbf16>, vector<32x128xbf16>, vector<8x128xf32> -> vector<8x128xf32>
    %381 = arith.truncf %355 : vector<8x32xf32> to vector<8x32xbf16>
    %cst_96 = arith.constant dense<0.000000e+00> : vector<8x128xf32>
    %382 = tpu.matmul %381, %9, %cst_96 {dimension_numbers = #tpu.dot_dimension_numbers<[1], [0], [0], [1], [0, 0, 1, 1], [], []>} : vector<8x32xbf16>, vector<32x128xbf16>, vector<8x128xf32> -> vector<8x128xf32>
    %383 = arith.addf %380, %382 : vector<8x128xf32>
    %384 = arith.addf %383, %12 : vector<8x128xf32>
    %385 = arith.mulf %384, %18 : vector<8x128xf32>
    %386 = arith.negf %385 : vector<8x128xf32>
    %387 = math.exp %386 : vector<8x128xf32>
    %cst_97 = arith.constant 1.000000e+00 : f32
    %388 = vector.broadcast %cst_97 : f32 to vector<8x128xf32>
    %389 = arith.addf %388, %387 : vector<8x128xf32>
    %390 = arith.divf %388, %389 : vector<8x128xf32>
    %391 = vector.extract_strided_slice %390 {offsets = [0, 0], sizes = [8, 32], strides = [1, 1]} : vector<8x128xf32> to vector<8x32xf32>
    %392 = vector.extract_strided_slice %390 {offsets = [0, 32], sizes = [8, 32], strides = [1, 1]} : vector<8x128xf32> to vector<8x32xf32>
    %393 = vector.extract_strided_slice %390 {offsets = [0, 64], sizes = [8, 32], strides = [1, 1]} : vector<8x128xf32> to vector<8x32xf32>
    %cst_98 = arith.constant 2.000000e+00 : f32
    %394 = vector.broadcast %cst_98 : f32 to vector<8x32xf32>
    %395 = arith.mulf %394, %393 : vector<8x32xf32>
    %cst_99 = arith.constant 1.000000e+00 : f32
    %396 = vector.broadcast %cst_99 : f32 to vector<8x32xf32>
    %397 = arith.subf %395, %396 : vector<8x32xf32>
    %398 = vector.extract_strided_slice %390 {offsets = [0, 96], sizes = [8, 32], strides = [1, 1]} : vector<8x128xf32> to vector<8x32xf32>
    %399 = arith.mulf %392, %353 : vector<8x32xf32>
    %400 = arith.mulf %391, %397 : vector<8x32xf32>
    %401 = arith.addf %399, %400 : vector<8x32xf32>
    %402 = math.tanh %401 : vector<8x32xf32>
    %403 = arith.mulf %398, %402 : vector<8x32xf32>
    %c0_100 = arith.constant 0 : index
    %c0_101 = arith.constant 0 : index
    %404 = vector.load %arg7[%c0_100, %c0_101] : memref<1x32xf32, #tpu.memory_space<vmem>>, vector<1x32xf32>
    %405 = vector.broadcast %404 : vector<1x32xf32> to vector<8x32xf32>
    %406 = arith.mulf %403, %405 : vector<8x32xf32>
    %cst_102 = arith.constant dense<0.000000e+00> : vector<8xf32>
    %407 = vector.multi_reduction <add>, %406, %cst_102 [1] : vector<8x32xf32> to vector<8xf32>
    %408 = vector.shape_cast %407 : vector<8xf32> to vector<8x1xf32>
    %c0_103 = arith.constant 0 : index
    %c0_104 = arith.constant 0 : index
    %409 = vector.load %arg8[%c0_103, %c0_104] : memref<1x1xf32, #tpu.memory_space<vmem>>, vector<1x1xf32>
    %410 = vector.broadcast %409 : vector<1x1xf32> to vector<8x1xf32>
    %411 = arith.addf %408, %410 : vector<8x1xf32>
    %c0_105 = arith.constant 0 : index
    %c0_106 = arith.constant 0 : index
    %412 = vector.load %arg9[%c0_105, %c0_106] : memref<8x1xf32, #tpu.memory_space<vmem>>, vector<8x1xf32>
    tpu.vector_store %arg9[%c0_105, %c0_106], %411 {strides = array<i32>} : memref<8x1xf32, #tpu.memory_space<vmem>>, vector<8x1xf32>,
    return
  }
}

</mosaic_0001>

<llo_original>
// kernel: tpu_custom_call.1
$region0: #{tpu_custom_call.1}
  #allocation0 [shape = 'u32[]', space=smem, size = 0x4, offset = 0x4, fixed_abs, tag = 'smem constant byte address 0x4 - core index']
  #allocation1 [shape = 'u32[144,128]{1,0:T(1,128)}', space=vmem, size = 0x12000, scoped, tag = 'internal scratch']
  #allocation2 [shape = 'f32[64,128]{1,0:T(8,128)}', space=vmem, size = 0x8000, scoped, tag = 'scratch operand']
  #allocation3 [shape = 'f32[1,1]{1,0:T(1,128)S(1)}', space=vmem, size = 0x200, scoped, tag = 'scoped memory for tpu_custom_call.1']
  %s0 = inlined_call_operand.vmem [shape: bf16[64,4], index: 0, kind: input, shape index: {}]
  %s1 = inlined_call_operand.hbm [shape: bf16[4,128], index: 1, kind: input, shape index: {}]
  %s2 = inlined_call_operand.vmem [shape: bf16[32,128], index: 2, kind: input, shape index: {}]
  %s3 = inlined_call_operand.vmem [shape: f32[1,128], index: 3, kind: input, shape index: {}]
  %s4 = inlined_call_operand.vmem [shape: bf16[32,128], index: 4, kind: input, shape index: {}]
  %s5 = inlined_call_operand.vmem [shape: bf16[32,128], index: 5, kind: input, shape index: {}]
  %s6 = inlined_call_operand.vmem [shape: f32[1,128], index: 6, kind: input, shape index: {}]
  %s7 = inlined_call_operand.vmem [shape: f32[1,32], index: 7, kind: input, shape index: {}]
  %s8 = inlined_call_operand.<no memory space> [shape: f32[1,1], index: 8, kind: input, shape index: {}]
  %s9 = inlined_call_operand.vmem [shape: f32[8,1], index: 9, kind: output, shape index: {}]
  %s10 = sld [smem:[#allocation0]]
  $region50: #{tpu_custom_call.1} parent=0
    _
  %s12 = ssub.s32 1, %s10
  %s13 = scalar_select 0, %s12, %s10
  %v14 = vstv %s8
  %15 = vst [vmem:[#allocation3] sm:$0x1] %v14
  $region1: #{tpu_custom_call.1} parent=0
    #allocation4 [shape = 'u8[1024]{0}', space=vmem, size = 0x400, scoped, tag = 'input window, operand 1, single buffered']
    #allocation5 [shape = 's32[1]{0}', space=sflag, size = 0x4, scoped, tag = 'scoped memory for tpu_custom_call.1']
    %16 = vsyncpa [#allocation5], 0
    // Predicated region
    $region2: #{tpu_custom_call.1} parent=1 // pred_check
      _
    $region3: #{tpu_custom_call.1} parent=1 // pred_check_branch
      %18 = sbr.rel (0) target = $region5
    $region4: #{tpu_custom_call.1} parent=1 // pred_region
      _
    $region5: #{tpu_custom_call.1} parent=1 // pred_fallthru
      _
    // Predicated region
    $region6: #{tpu_custom_call.1} parent=1 // pred_check
      _
    $region7: #{tpu_custom_call.1} parent=1 // pred_check_branch
      %20 = sbr.rel (0) target = $region9
    $region8: #{tpu_custom_call.1} parent=1 // pred_region
      %s22 = ssub.s32 32, 32
      %23 = vsyncadd [#allocation5], %s22
      %s25 = sshll.u32 [#allocation4], 4
      %s26 = int_to_ptr.vmem [resolvable:$true] %s25
      %28 = dma.hbm_to_vmem [thread:$0]  %s1, 32, %s26, [#allocation5]
    $region9: #{tpu_custom_call.1} parent=1 // pred_fallthru
      _
    // Predicated region
    $region10: #{tpu_custom_call.1} parent=1 // pred_check
      _
    $region11: #{tpu_custom_call.1} parent=1 // pred_check_branch
      %30 = sbr.rel (0) target = $region13
    $region12: #{tpu_custom_call.1} parent=1 // pred_region
      _
    $region13: #{tpu_custom_call.1} parent=1 // pred_fallthru
      _
    // Predicated region
    $region14: #{tpu_custom_call.1} parent=1 // pred_check
      _
    $region15: #{tpu_custom_call.1} parent=1 // pred_check_branch
      %32 = sbr.rel (0) target = $region17
    $region16: #{tpu_custom_call.1} parent=1 // pred_region
      _
    $region17: #{tpu_custom_call.1} parent=1 // pred_fallthru
      _
    // Predicated region
    $region18: #{tpu_custom_call.1} parent=1 // pred_check
      _
    $region19: #{tpu_custom_call.1} parent=1 // pred_check_branch
      %34 = sbr.rel (0) target = $region21
    $region20: #{tpu_custom_call.1} parent=1 // pred_region
      _
    $region21: #{tpu_custom_call.1} parent=1 // pred_fallthru
      _
    // Predicated region
    $region22: #{tpu_custom_call.1} parent=1 // pred_check
      _
    $region23: #{tpu_custom_call.1} parent=1 // pred_check_branch
      %36 = sbr.rel (0) target = $region25
    $region24: #{tpu_custom_call.1} parent=1 // pred_region
      _
    $region25: #{tpu_custom_call.1} parent=1 // pred_fallthru
      _
    // Predicated region
    $region26: #{tpu_custom_call.1} parent=1 // pred_check
      _
    $region27: #{tpu_custom_call.1} parent=1 // pred_check_branch
      %38 = sbr.rel (0) target = $region29
    $region28: #{tpu_custom_call.1} parent=1 // pred_region
      _
    $region29: #{tpu_custom_call.1} parent=1 // pred_fallthru
      _
    // Predicated region
    $region30: #{tpu_custom_call.1} parent=1 // pred_check
      _
    $region31: #{tpu_custom_call.1} parent=1 // pred_check_branch
      %40 = sbr.rel (0) target = $region33
    $region32: #{tpu_custom_call.1} parent=1 // pred_region
      _
    $region33: #{tpu_custom_call.1} parent=1 // pred_fallthru
      _
    // Predicated region
    $region34: #{tpu_custom_call.1} parent=1 // pred_check
      _
    $region35: #{tpu_custom_call.1} parent=1 // pred_check_branch
      %42 = sbr.rel (0) target = $region37
    $region36: #{tpu_custom_call.1} parent=1 // pred_region
      _
    $region37: #{tpu_custom_call.1} parent=1 // pred_fallthru
      _
    // Predicated region
    $region38: #{tpu_custom_call.1} parent=1 // pred_check
      _
    $region39: #{tpu_custom_call.1} parent=1 // pred_check_branch
      %44 = sbr.rel (0) target = $region41
    $region40: #{tpu_custom_call.1} parent=1 // pred_region
      %45 = dma.done [#allocation5], 32
    $region41: #{tpu_custom_call.1} parent=1 // pred_fallthru
      _
    %v47 = vld [vmem:[%s0] sm:$0xf]
    %v48 = vld [vmem:[%s0 + $0x4] sm:$0xf]
    %v49 = vld [vmem:[%s0 + $0x8] sm:$0xf]
    %v50 = vld [vmem:[%s0 + $0xc] sm:$0xf]
    %v51 = vld [vmem:[%s0 + $0x10] sm:$0xf]
    %v52 = vld [vmem:[%s0 + $0x14] sm:$0xf]
    %v53 = vld [vmem:[%s0 + $0x18] sm:$0xf]
    %v54 = vld [vmem:[%s0 + $0x1c] sm:$0xf]
    %v55 = vld [vmem:[#allocation4] sm:$0x3]
    %v56 = vld [vmem:[%s3] sm:$0x1]
    %v58 = vlaneseq
    %v59 = vshrl.u32 %v58, 7
    %v60 = vsub.s32 0, %v59
    %v61 = vrot.slane %v56, %v60
    %v71 = vunpack.c.l.b16 %v47
    %v72 = vunpack.c.l.b16 %v48
    %v73 = vunpack.c.l.b16 %v49
    %v74 = vunpack.c.l.b16 %v50
    %v75 = vunpack.c.l.b16 %v51
    %v76 = vunpack.c.l.b16 %v52
    %v77 = vunpack.c.l.b16 %v53
    %v78 = vunpack.c.l.b16 %v54
    %v79 = vpack.c.b16 %v72, %v71
    %v80 = vpack.c.b16 %v74, %v73
    %v81 = vpack.c.b16 %v76, %v75
    %v82 = vpack.c.b16 %v78, %v77
    %vm83 = vcmask 31744
    %v85 = vsel %vm83, %v79, 0
    %v88 = vsel %vm83, %v80, 0
    %v91 = vsel %vm83, %v81, 0
    %v94 = vsel %vm83, %v82, 0
    %vm96 = vcmask 1041408
    %v98 = vsel %vm96, %v55, 0
    %100 = vmatprep.subr.bf16.mxu0 0
    %101 = vmatpush1.bf16.msra.mxu0 %v98
    %102 = vmatprep.subr.bf16.mxu0 0
    %103 = vmatpush1.bf16.msra.mxu0 0
    %104 = vmatprep.subr.bf16.mxu0 0
    %105 = vmatpush1.bf16.msra.mxu0 0
    %106 = vmatprep.subr.bf16.mxu0 0
    %107 = vmatpush1.bf16.msra.mxu0 0
    %108 = vmatprep.subr.bf16.mxu0 0
    %109 = vmatpush1.bf16.msra.mxu0 0
    %110 = vmatprep.subr.bf16.mxu0 0
    %111 = vmatpush1.bf16.msra.mxu0 0
    %112 = vmatprep.subr.bf16.mxu0 0
    %113 = vmatpush1.bf16.msra.mxu0 0
    %114 = vmatprep.subr.bf16.mxu0 0
    %115 = vmatpush1.bf16.msra.mxu0 0
    %116 = vmatprep.subr.bf16.mxu0 0
    %117 = vmatpush1.bf16.msra.mxu0 0
    %118 = vmatprep.subr.bf16.mxu0 0
    %119 = vmatpush1.bf16.msra.mxu0 0
    %120 = vmatprep.subr.bf16.mxu0 0
    %121 = vmatpush1.bf16.msra.mxu0 0
    %122 = vmatprep.subr.bf16.mxu0 0
    %123 = vmatpush1.bf16.msra.mxu0 0
    %124 = vmatprep.subr.bf16.mxu0 0
    %125 = vmatpush1.bf16.msra.mxu0 0
    %126 = vmatprep.subr.bf16.mxu0 0
    %127 = vmatpush1.bf16.msra.mxu0 0
    %128 = vmatprep.subr.bf16.mxu0 0
    %129 = vmatpush1.bf16.msra.mxu0 0
    %130 = vmatprep.subr.bf16.mxu0 0
    %131 = vmatpush1.bf16.msra.mxu0 0
    %132 = vmatprep.mubr.bf16.mxu0 0
    %133 = vmatmul.mubr.bf16.gmra.mrb[0].mxu0 %v85
    %v134 = vpop.f32.mrb[0].mxu0
    %v135 = vadd.f32 %v61, %v134
    %v136 = vpop.f32.mrb[0].mxu0
    %v137 = vpop.f32.mrb[0].mxu0
    %v138 = vadd.f32 %v61, %v137
    %v139 = vpop.f32.mrb[0].mxu0
    %140 = vmatprep.mubr.bf16.mxu0 0
    %141 = vmatmul.mubr.bf16.gmra.mrb[0].mxu0 %v88
    %v142 = vpop.f32.mrb[0].mxu0
    %v143 = vadd.f32 %v61, %v142
    %v144 = vpop.f32.mrb[0].mxu0
    %v145 = vpop.f32.mrb[0].mxu0
    %v146 = vadd.f32 %v61, %v145
    %v147 = vpop.f32.mrb[0].mxu0
    %148 = vmatprep.mubr.bf16.mxu0 0
    %149 = vmatmul.mubr.bf16.gmra.mrb[0].mxu0 %v91
    %v150 = vpop.f32.mrb[0].mxu0
    %v151 = vadd.f32 %v61, %v150
    %v152 = vpop.f32.mrb[0].mxu0
    %v153 = vpop.f32.mrb[0].mxu0
    %v154 = vadd.f32 %v61, %v153
    %v155 = vpop.f32.mrb[0].mxu0
    %156 = vmatprep.mubr.bf16.mxu0 0
    %157 = vmatmul.mubr.bf16.gmra.mrb[0].mxu0 %v94
    %v158 = vpop.f32.mrb[0].mxu0
    %v159 = vadd.f32 %v61, %v158
    %v160 = vpop.f32.mrb[0].mxu0
    %v161 = vpop.f32.mrb[0].mxu0
    %v162 = vadd.f32 %v61, %v161
    %v163 = vpop.f32.mrb[0].mxu0
    %164 = vdwg.mxu0
    %165 = vst [vmem:[#allocation2] sm:$0xff] %v135
    %166 = vst [vmem:[#allocation2 + $0x8] sm:$0xff] %v138
    %167 = vst [vmem:[#allocation2 + $0x10] sm:$0xff] %v143
    %168 = vst [vmem:[#allocation2 + $0x18] sm:$0xff] %v146
    %169 = vst [vmem:[#allocation2 + $0x20] sm:$0xff] %v151
    %170 = vst [vmem:[#allocation2 + $0x28] sm:$0xff] %v154
    %171 = vst [vmem:[#allocation2 + $0x30] sm:$0xff] %v159
    %172 = vst [vmem:[#allocation2 + $0x38] sm:$0xff] %v162
    %v173 = vld [vmem:[%s2] sm:$0xf]
    %v174 = vld [vmem:[%s2 + $0x4] sm:$0xf]
    %v175 = vld [vmem:[%s2 + $0x8] sm:$0xf]
    %v176 = vld [vmem:[%s2 + $0xc] sm:$0xf]
    %v177 = vld [vmem:[%s4] sm:$0xf]
    %v178 = vld [vmem:[%s4 + $0x4] sm:$0xf]
    %v179 = vld [vmem:[%s4 + $0x8] sm:$0xf]
    %v180 = vld [vmem:[%s4 + $0xc] sm:$0xf]
    %v181 = vld [vmem:[%s5] sm:$0xf]
    %v182 = vld [vmem:[%s5 + $0x4] sm:$0xf]
    %v183 = vld [vmem:[%s5 + $0x8] sm:$0xf]
    %v184 = vld [vmem:[%s5 + $0xc] sm:$0xf]
    %v185 = vld [vmem:[%s6] sm:$0x1]
    %v187 = vlaneseq
    %v188 = vshrl.u32 %v187, 7
    %v189 = vsub.s32 0, %v188
    %v190 = vrot.slane %v185, %v189
    %vm192 = vcmask 523264
    %v193 = vsel %vm192, 1.0, 2.0
    %vm194 = vcmask 785408
    %v195 = vsel %vm194, %v193, 1.0
    %v196 = vlaneseq
    %v197 = vshrl.u32 %v196, 7
    %v198 = vsub.s32 0, %v197
    %v199 = vrot.slane %v195, %v198
    %v200 = vld [vmem:[#allocation2] sm:$0xff]
    %v205 = vunpack.c.l.b16 %v173
    %v206 = vunpack.c.l.b16 %v174
    %v207 = vunpack.c.l.b16 %v175
    %v208 = vunpack.c.l.b16 %v176
    %v209 = vpack.c.b16 %v206, %v205
    %v210 = vpack.c.b16 %v208, %v207
    %vm213 = vcmask 261120
    %v215 = vsel %vm213, 0, 0
    %217 = vmatprep.subr.bf16.mxu0 0
    %218 = vmatpush1.bf16.msra.mxu0 %v209
    %219 = vmatprep.subr.bf16.mxu0 0
    %220 = vmatpush1.bf16.msra.mxu0 %v210
    %221 = vmatprep.subr.bf16.mxu0 0
    %222 = vmatpush1.bf16.msra.mxu0 0
    %223 = vmatprep.subr.bf16.mxu0 0
    %224 = vmatpush1.bf16.msra.mxu0 0
    %225 = vmatprep.subr.bf16.mxu0 0
    %226 = vmatpush1.bf16.msra.mxu0 0
    %227 = vmatprep.subr.bf16.mxu0 0
    %228 = vmatpush1.bf16.msra.mxu0 0
    %229 = vmatprep.subr.bf16.mxu0 0
    %230 = vmatpush1.bf16.msra.mxu0 0
    %231 = vmatprep.subr.bf16.mxu0 0
    %232 = vmatpush1.bf16.msra.mxu0 0
    %233 = vmatprep.subr.bf16.mxu0 0
    %234 = vmatpush1.bf16.msra.mxu0 0
    %235 = vmatprep.subr.bf16.mxu0 0
    %236 = vmatpush1.bf16.msra.mxu0 0
    %237 = vmatprep.subr.bf16.mxu0 0
    %238 = vmatpush1.bf16.msra.mxu0 0
    %239 = vmatprep.subr.bf16.mxu0 0
    %240 = vmatpush1.bf16.msra.mxu0 0
    %241 = vmatprep.subr.bf16.mxu0 0
    %242 = vmatpush1.bf16.msra.mxu0 0
    %243 = vmatprep.subr.bf16.mxu0 0
    %244 = vmatpush1.bf16.msra.mxu0 0
    %245 = vmatprep.subr.bf16.mxu0 0
    %246 = vmatpush1.bf16.msra.mxu0 0
    %247 = vmatprep.subr.bf16.mxu0 0
    %248 = vmatpush1.bf16.msra.mxu0 0
    %249 = vmatprep.mubr.bf16.mxu0 0
    %250 = vmatmul.mubr.bf16.gmra.mrb[0].mxu0 %v215
    %v251 = vpop.f32.mrb[0].mxu0
    %v252 = vadd.f32 0.0, %v251
    %v253 = vpop.f32.mrb[0].mxu0
    %v254 = vpop.f32.mrb[0].mxu0
    %v255 = vpop.f32.mrb[0].mxu0
    %256 = vdwg.mxu0
    %v257 = vadd.f32 %v200, %v252
    %v258 = vmul.f32 %v257, %v199
    %v259 = vxor.u32 %v258, 2147483648
    %v260 = vmul.f32 %v259, 1.442695
    %v261 = vpow.pop %v260
    %v262 = vadd.f32 %v261, 1.0
    %v263 = vrcp.pop %v262
    %v264 = vmul.f32 1.0, %v263
    %v265 = vmul.f32 %v264, 2.0
    %v266 = vsub.f32 %v265, 1.0
    %v267 = vmul.f32 %v264, 0.0
    %269 = vrot.lane.b32.xlu0 %v266, 64
    %v270 = vpop.permute.xlu0 %269
    %v272 = vmul.f32 %v264, %v270
    %274 = vrot.lane.b32.xlu0 %v272, 32
    %v275 = vpop.permute.xlu0 %274
    %v277 = vadd.f32 %v267, %v275
    %v278 = vtanh.pop %v277
    %280 = vrot.lane.b32.xlu0 %v278, 64
    %v281 = vpop.permute.xlu0 %280
    %v283 = vmul.f32 %v264, %v281
    %v284 = vpack.c.bf16 %v283, %v283
    %v289 = vunpack.c.l.b16 %v181
    %v290 = vunpack.c.l.b16 %v182
    %v291 = vunpack.c.l.b16 %v183
    %v292 = vunpack.c.l.b16 %v184
    %v293 = vpack.c.b16 %v290, %v289
    %v294 = vpack.c.b16 %v292, %v291
    %297 = vmatprep.subr.bf16.mxu0 0
    %298 = vmatpush1.bf16.msra.mxu0 %v293
    %299 = vmatprep.subr.bf16.mxu0 0
    %300 = vmatpush1.bf16.msra.mxu0 %v294
    %301 = vmatprep.subr.bf16.mxu0 0
    %302 = vmatpush1.bf16.msra.mxu0 0
    %303 = vmatprep.subr.bf16.mxu0 0
    %304 = vmatpush1.bf16.msra.mxu0 0
    %305 = vmatprep.subr.bf16.mxu0 0
    %306 = vmatpush1.bf16.msra.mxu0 0
    %307 = vmatprep.subr.bf16.mxu0 0
    %308 = vmatpush1.bf16.msra.mxu0 0
    %309 = vmatprep.subr.bf16.mxu0 0
    %310 = vmatpush1.bf16.msra.mxu0 0
    %311 = vmatprep.subr.bf16.mxu0 0
    %312 = vmatpush1.bf16.msra.mxu0 0
    %313 = vmatprep.subr.bf16.mxu0 0
    %314 = vmatpush1.bf16.msra.mxu0 0
    %315 = vmatprep.subr.bf16.mxu0 0
    %316 = vmatpush1.bf16.msra.mxu0 0
    %317 = vmatprep.subr.bf16.mxu0 0
    %318 = vmatpush1.bf16.msra.mxu0 0
    %319 = vmatprep.subr.bf16.mxu0 0
    %320 = vmatpush1.bf16.msra.mxu0 0
    %321 = vmatprep.subr.bf16.mxu0 0
    %322 = vmatpush1.bf16.msra.mxu0 0
    %323 = vmatprep.subr.bf16.mxu0 0
    %324 = vmatpush1.bf16.msra.mxu0 0
    %325 = vmatprep.subr.bf16.mxu0 0
    %326 = vmatpush1.bf16.msra.mxu0 0
    %327 = vmatprep.subr.bf16.mxu0 0
    %328 = vmatpush1.bf16.msra.mxu0 0
    %329 = vmatprep.mubr.bf16.mxu0 0
    %330 = vmatmul.mubr.bf16.gmra.mrb[0].mxu0 %v215
    %v331 = vpop.f32.mrb[0].mxu0
    %v332 = vadd.f32 0.0, %v331
    %v333 = vpop.f32.mrb[0].mxu0
    %v334 = vpop.f32.mrb[0].mxu0
    %v335 = vpop.f32.mrb[0].mxu0
    %336 = vdwg.mxu0
    %338 = vrot.lane.b32.xlu0 %v284, 32
    %v339 = vpop.permute.xlu0 %338
    %v344 = vunpack.c.l.b16 %v177
    %v345 = vunpack.c.l.b16 %v178
    %v346 = vunpack.c.l.b16 %v179
    %v347 = vunpack.c.l.b16 %v180
    %v348 = vpack.c.b16 %v345, %v344
    %v349 = vpack.c.b16 %v347, %v346
    %v353 = vsel %vm213, %v339, 0
    %355 = vmatprep.subr.bf16.mxu0 0
    %356 = vmatpush1.bf16.msra.mxu0 %v348
    %357 = vmatprep.subr.bf16.mxu0 0
    %358 = vmatpush1.bf16.msra.mxu0 %v349
    %359 = vmatprep.subr.bf16.mxu0 0
    %360 = vmatpush1.bf16.msra.mxu0 0
    %361 = vmatprep.subr.bf16.mxu0 0
    %362 = vmatpush1.bf16.msra.mxu0 0
    %363 = vmatprep.subr.bf16.mxu0 0
    %364 = vmatpush1.bf16.msra.mxu0 0
    %365 = vmatprep.subr.bf16.mxu0 0
    %366 = vmatpush1.bf16.msra.mxu0 0
    %367 = vmatprep.subr.bf16.mxu0 0
    %368 = vmatpush1.bf16.msra.mxu0 0
    %369 = vmatprep.subr.bf16.mxu0 0
    %370 = vmatpush1.bf16.msra.mxu0 0
    %371 = vmatprep.subr.bf16.mxu0 0
    %372 = vmatpush1.bf16.msra.mxu0 0
    %373 = vmatprep.subr.bf16.mxu0 0
    %374 = vmatpush1.bf16.msra.mxu0 0
    %375 = vmatprep.subr.bf16.mxu0 0
    %376 = vmatpush1.bf16.msra.mxu0 0
    %377 = vmatprep.subr.bf16.mxu0 0
    %378 = vmatpush1.bf16.msra.mxu0 0
    %379 = vmatprep.subr.bf16.mxu0 0
    %380 = vmatpush1.bf16.msra.mxu0 0
    %381 = vmatprep.subr.bf16.mxu0 0
    %382 = vmatpush1.bf16.msra.mxu0 0
    %383 = vmatprep.subr.bf16.mxu0 0
    %384 = vmatpush1.bf16.msra.mxu0 0
    %385 = vmatprep.subr.bf16.mxu0 0
    %386 = vmatpush1.bf16.msra.mxu0 0
    %387 = vmatprep.mubr.bf16.mxu0 0
    %388 = vmatmul.mubr.bf16.gmra.mrb[0].mxu0 %v353
    %v389 = vpop.f32.mrb[0].mxu0
    %v390 = vadd.f32 %v332, %v389
    %v391 = vpop.f32.mrb[0].mxu0
    %v392 = vpop.f32.mrb[0].mxu0
    %v393 = vpop.f32.mrb[0].mxu0
    %394 = vdwg.mxu0
    %v395 = vadd.f32 %v390, %v190
    %v396 = vmul.f32 %v395, %v199
    %v397 = vxor.u32 %v396, 2147483648
    %v398 = vmul.f32 %v397, 1.442695
    %v399 = vpow.pop %v398
    %v400 = vadd.f32 %v399, 1.0
    %v401 = vrcp.pop %v400
    %v402 = vmul.f32 1.0, %v401
    %v403 = vmul.f32 %v402, 2.0
    %v404 = vsub.f32 %v403, 1.0
    %v405 = vmul.f32 %v402, 0.0
    %407 = vrot.lane.b32.xlu0 %v404, 64
    %v408 = vpop.permute.xlu0 %407
    %v410 = vmul.f32 %v402, %v408
    %412 = vrot.lane.b32.xlu0 %v410, 32
    %v413 = vpop.permute.xlu0 %412
    %v415 = vadd.f32 %v405, %v413
    %v416 = vtanh.pop %v415
    %418 = vrot.lane.b32.xlu0 %v416, 64
    %v419 = vpop.permute.xlu0 %418
    %v421 = vmul.f32 %v402, %v419
    %v422 = vld [vmem:[#allocation2 + $0x8] sm:$0xff]
    %423 = vmatprep.subr.bf16.mxu0 0
    %424 = vmatpush1.bf16.msra.mxu0 %v209
    %425 = vmatprep.subr.bf16.mxu0 0
    %426 = vmatpush1.bf16.msra.mxu0 %v210
    %427 = vmatprep.subr.bf16.mxu0 0
    %428 = vmatpush1.bf16.msra.mxu0 0
    %429 = vmatprep.subr.bf16.mxu0 0
    %430 = vmatpush1.bf16.msra.mxu0 0
    %431 = vmatprep.subr.bf16.mxu0 0
    %432 = vmatpush1.bf16.msra.mxu0 0
    %433 = vmatprep.subr.bf16.mxu0 0
    %434 = vmatpush1.bf16.msra.mxu0 0
    %435 = vmatprep.subr.bf16.mxu0 0
    %436 = vmatpush1.bf16.msra.mxu0 0
    %437 = vmatprep.subr.bf16.mxu0 0
    %438 = vmatpush1.bf16.msra.mxu0 0
    %439 = vmatprep.subr.bf16.mxu0 0
    %440 = vmatpush1.bf16.msra.mxu0 0
    %441 = vmatprep.subr.bf16.mxu0 0
    %442 = vmatpush1.bf16.msra.mxu0 0
    %443 = vmatprep.subr.bf16.mxu0 0
    %444 = vmatpush1.bf16.msra.mxu0 0
    %445 = vmatprep.subr.bf16.mxu0 0
    %446 = vmatpush1.bf16.msra.mxu0 0
    %447 = vmatprep.subr.bf16.mxu0 0
    %448 = vmatpush1.bf16.msra.mxu0 0
    %449 = vmatprep.subr.bf16.mxu0 0
    %450 = vmatpush1.bf16.msra.mxu0 0
    %451 = vmatprep.subr.bf16.mxu0 0
    %452 = vmatpush1.bf16.msra.mxu0 0
    %453 = vmatprep.subr.bf16.mxu0 0
    %454 = vmatpush1.bf16.msra.mxu0 0
    %455 = vmatprep.mubr.bf16.mxu0 0
    %456 = vmatmul.mubr.bf16.gmra.mrb[0].mxu0 %v353
    %v457 = vpop.f32.mrb[0].mxu0
    %v458 = vadd.f32 0.0, %v457
    %v459 = vpop.f32.mrb[0].mxu0
    %v460 = vpop.f32.mrb[0].mxu0
    %v461 = vpop.f32.mrb[0].mxu0
    %462 = vdwg.mxu0
    %v463 = vadd.f32 %v422, %v458
    %v464 = vmul.f32 %v463, %v199
    %v465 = vxor.u32 %v464, 2147483648
    %v466 = vmul.f32 %v465, 1.442695
    %v467 = vpow.pop %v466
    %v468 = vadd.f32 %v467, 1.0
    %v469 = vrcp.pop %v468
    %v470 = vmul.f32 1.0, %v469
    %v471 = vmul.f32 %v470, 2.0
    %v472 = vsub.f32 %v471, 1.0
    %v473 = vmul.f32 %v470, %v277
    %475 = vrot.lane.b32.xlu0 %v472, 64
    %v476 = vpop.permute.xlu0 %475
    %v478 = vmul.f32 %v470, %v476
    %480 = vrot.lane.b32.xlu0 %v478, 32
    %v481 = vpop.permute.xlu0 %480
    %v483 = vadd.f32 %v473, %v481
    %v484 = vtanh.pop %v483
    %486 = vrot.lane.b32.xlu0 %v484, 64
    %v487 = vpop.permute.xlu0 %486
    %v489 = vmul.f32 %v470, %v487
    %v490 = vpack.c.bf16 %v489, %v489
    %v491 = vpack.c.bf16 %v421, %v421
    %493 = vrot.lane.b32.xlu0 %v491, 32
    %v494 = vpop.permute.xlu0 %493
    %v496 = vsel %vm213, %v494, 0
    %498 = vmatprep.subr.bf16.mxu0 0
    %499 = vmatpush1.bf16.msra.mxu0 %v293
    %500 = vmatprep.subr.bf16.mxu0 0
    %501 = vmatpush1.bf16.msra.mxu0 %v294
    %502 = vmatprep.subr.bf16.mxu0 0
    %503 = vmatpush1.bf16.msra.mxu0 0
    %504 = vmatprep.subr.bf16.mxu0 0
    %505 = vmatpush1.bf16.msra.mxu0 0
    %506 = vmatprep.subr.bf16.mxu0 0
    %507 = vmatpush1.bf16.msra.mxu0 0
    %508 = vmatprep.subr.bf16.mxu0 0
    %509 = vmatpush1.bf16.msra.mxu0 0
    %510 = vmatprep.subr.bf16.mxu0 0
    %511 = vmatpush1.bf16.msra.mxu0 0
    %512 = vmatprep.subr.bf16.mxu0 0
    %513 = vmatpush1.bf16.msra.mxu0 0
    %514 = vmatprep.subr.bf16.mxu0 0
    %515 = vmatpush1.bf16.msra.mxu0 0
    %516 = vmatprep.subr.bf16.mxu0 0
    %517 = vmatpush1.bf16.msra.mxu0 0
    %518 = vmatprep.subr.bf16.mxu0 0
    %519 = vmatpush1.bf16.msra.mxu0 0
    %520 = vmatprep.subr.bf16.mxu0 0
    %521 = vmatpush1.bf16.msra.mxu0 0
    %522 = vmatprep.subr.bf16.mxu0 0
    %523 = vmatpush1.bf16.msra.mxu0 0
    %524 = vmatprep.subr.bf16.mxu0 0
    %525 = vmatpush1.bf16.msra.mxu0 0
    %526 = vmatprep.subr.bf16.mxu0 0
    %527 = vmatpush1.bf16.msra.mxu0 0
    %528 = vmatprep.subr.bf16.mxu0 0
    %529 = vmatpush1.bf16.msra.mxu0 0
    %530 = vmatprep.mubr.bf16.mxu0 0
    %531 = vmatmul.mubr.bf16.gmra.mrb[0].mxu0 %v496
    %v532 = vpop.f32.mrb[0].mxu0
    %v533 = vadd.f32 0.0, %v532
    %v534 = vpop.f32.mrb[0].mxu0
    %v535 = vpop.f32.mrb[0].mxu0
    %v536 = vpop.f32.mrb[0].mxu0
    %537 = vdwg.mxu0
    %539 = vrot.lane.b32.xlu0 %v490, 32
    %v540 = vpop.permute.xlu0 %539
    %v542 = vsel %vm213, %v540, 0
    %544 = vmatprep.subr.bf16.mxu0 0
    %545 = vmatpush1.bf16.msra.mxu0 %v348
    %546 = vmatprep.subr.bf16.mxu0 0
    %547 = vmatpush1.bf16.msra.mxu0 %v349
    %548 = vmatprep.subr.bf16.mxu0 0
    %549 = vmatpush1.bf16.msra.mxu0 0
    %550 = vmatprep.subr.bf16.mxu0 0
    %551 = vmatpush1.bf16.msra.mxu0 0
    %552 = vmatprep.subr.bf16.mxu0 0
    %553 = vmatpush1.bf16.msra.mxu0 0
    %554 = vmatprep.subr.bf16.mxu0 0
    %555 = vmatpush1.bf16.msra.mxu0 0
    %556 = vmatprep.subr.bf16.mxu0 0
    %557 = vmatpush1.bf16.msra.mxu0 0
    %558 = vmatprep.subr.bf16.mxu0 0
    %559 = vmatpush1.bf16.msra.mxu0 0
    %560 = vmatprep.subr.bf16.mxu0 0
    %561 = vmatpush1.bf16.msra.mxu0 0
    %562 = vmatprep.subr.bf16.mxu0 0
    %563 = vmatpush1.bf16.msra.mxu0 0
    %564 = vmatprep.subr.bf16.mxu0 0
    %565 = vmatpush1.bf16.msra.mxu0 0
    %566 = vmatprep.subr.bf16.mxu0 0
    %567 = vmatpush1.bf16.msra.mxu0 0
    %568 = vmatprep.subr.bf16.mxu0 0
    %569 = vmatpush1.bf16.msra.mxu0 0
    %570 = vmatprep.subr.bf16.mxu0 0
    %571 = vmatpush1.bf16.msra.mxu0 0
    %572 = vmatprep.subr.bf16.mxu0 0
    %573 = vmatpush1.bf16.msra.mxu0 0
    %574 = vmatprep.subr.bf16.mxu0 0
    %575 = vmatpush1.bf16.msra.mxu0 0
    %576 = vmatprep.mubr.bf16.mxu0 0
    %577 = vmatmul.mubr.bf16.gmra.mrb[0].mxu0 %v542
    %v578 = vpop.f32.mrb[0].mxu0
    %v579 = vadd.f32 %v533, %v578
    %v580 = vpop.f32.mrb[0].mxu0
    %v581 = vpop.f32.mrb[0].mxu0
    %v582 = vpop.f32.mrb[0].mxu0
    %583 = vdwg.mxu0
    %v584 = vadd.f32 %v579, %v190
    %v585 = vmul.f32 %v584, %v199
    %v586 = vxor.u32 %v585, 2147483648
    %v587 = vmul.f32 %v586, 1.442695
    %v588 = vpow.pop %v587
    %v589 = vadd.f32 %v588, 1.0
    %v590 = vrcp.pop %v589
    %v591 = vmul.f32 1.0, %v590
    %v592 = vmul.f32 %v591, 2.0
    %v593 = vsub.f32 %v592, 1.0
    %v594 = vmul.f32 %v591, %v415
    %596 = vrot.lane.b32.xlu0 %v593, 64
    %v597 = vpop.permute.xlu0 %596
    %v599 = vmul.f32 %v591, %v597
    %601 = vrot.lane.b32.xlu0 %v599, 32
    %v602 = vpop.permute.xlu0 %601
    %v604 = vadd.f32 %v594, %v602
    %v605 = vtanh.pop %v604
    %607 = vrot.lane.b32.xlu0 %v605, 64
    %v608 = vpop.permute.xlu0 %607
    %v610 = vmul.f32 %v591, %v608
    %v611 = vld [vmem:[#allocation2 + $0x10] sm:$0xff]
    %612 = vmatprep.subr.bf16.mxu0 0
    %613 = vmatpush1.bf16.msra.mxu0 %v209
    %614 = vmatprep.subr.bf16.mxu0 0
    %615 = vmatpush1.bf16.msra.mxu0 %v210
    %616 = vmatprep.subr.bf16.mxu0 0
    %617 = vmatpush1.bf16.msra.mxu0 0
    %618 = vmatprep.subr.bf16.mxu0 0
    %619 = vmatpush1.bf16.msra.mxu0 0
    %620 = vmatprep.subr.bf16.mxu0 0
    %621 = vmatpush1.bf16.msra.mxu0 0
    %622 = vmatprep.subr.bf16.mxu0 0
    %623 = vmatpush1.bf16.msra.mxu0 0
    %624 = vmatprep.subr.bf16.mxu0 0
    %625 = vmatpush1.bf16.msra.mxu0 0
    %626 = vmatprep.subr.bf16.mxu0 0
    %627 = vmatpush1.bf16.msra.mxu0 0
    %628 = vmatprep.subr.bf16.mxu0 0
    %629 = vmatpush1.bf16.msra.mxu0 0
    %630 = vmatprep.subr.bf16.mxu0 0
    %631 = vmatpush1.bf16.msra.mxu0 0
    %632 = vmatprep.subr.bf16.mxu0 0
    %633 = vmatpush1.bf16.msra.mxu0 0
    %634 = vmatprep.subr.bf16.mxu0 0
    %635 = vmatpush1.bf16.msra.mxu0 0
    %636 = vmatprep.subr.bf16.mxu0 0
    %637 = vmatpush1.bf16.msra.mxu0 0
    %638 = vmatprep.subr.bf16.mxu0 0
    %639 = vmatpush1.bf16.msra.mxu0 0
    %640 = vmatprep.subr.bf16.mxu0 0
    %641 = vmatpush1.bf16.msra.mxu0 0
    %642 = vmatprep.subr.bf16.mxu0 0
    %643 = vmatpush1.bf16.msra.mxu0 0
    %644 = vmatprep.mubr.bf16.mxu0 0
    %645 = vmatmul.mubr.bf16.gmra.mrb[0].mxu0 %v542
    %v646 = vpop.f32.mrb[0].mxu0
    %v647 = vadd.f32 0.0, %v646
    %v648 = vpop.f32.mrb[0].mxu0
    %v649 = vpop.f32.mrb[0].mxu0
    %v650 = vpop.f32.mrb[0].mxu0
    %651 = vdwg.mxu0
    %v652 = vadd.f32 %v611, %v647
    %v653 = vmul.f32 %v652, %v199
    %v654 = vxor.u32 %v653, 2147483648
    %v655 = vmul.f32 %v654, 1.442695
    %v656 = vpow.pop %v655
    %v657 = vadd.f32 %v656, 1.0
    %v658 = vrcp.pop %v657
    %v659 = vmul.f32 1.0, %v658
    %v660 = vmul.f32 %v659, 2.0
    %v661 = vsub.f32 %v660, 1.0
    %v662 = vmul.f32 %v659, %v483
    %664 = vrot.lane.b32.xlu0 %v661, 64
    %v665 = vpop.permute.xlu0 %664
    %v667 = vmul.f32 %v659, %v665
    %669 = vrot.lane.b32.xlu0 %v667, 32
    %v670 = vpop.permute.xlu0 %669
    %v672 = vadd.f32 %v662, %v670
    %v673 = vtanh.pop %v672
    %675 = vrot.lane.b32.xlu0 %v673, 64
    %v676 = vpop.permute.xlu0 %675
    %v678 = vmul.f32 %v659, %v676
    %v679 = vpack.c.bf16 %v678, %v678
    %v680 = vpack.c.bf16 %v610, %v610
    %682 = vrot.lane.b32.xlu0 %v680, 32
    %v683 = vpop.permute.xlu0 %682
    %v685 = vsel %vm213, %v683, 0
    %687 = vmatprep.subr.bf16.mxu0 0
    %688 = vmatpush1.bf16.msra.mxu0 %v293
    %689 = vmatprep.subr.bf16.mxu0 0
    %690 = vmatpush1.bf16.msra.mxu0 %v294
    %691 = vmatprep.subr.bf16.mxu0 0
    %692 = vmatpush1.bf16.msra.mxu0 0
    %693 = vmatprep.subr.bf16.mxu0 0
    %694 = vmatpush1.bf16.msra.mxu0 0
    %695 = vmatprep.subr.bf16.mxu0 0
    %696 = vmatpush1.bf16.msra.mxu0 0
    %697 = vmatprep.subr.bf16.mxu0 0
    %698 = vmatpush1.bf16.msra.mxu0 0
    %699 = vmatprep.subr.bf16.mxu0 0
    %700 = vmatpush1.bf16.msra.mxu0 0
    %701 = vmatprep.subr.bf16.mxu0 0
    %702 = vmatpush1.bf16.msra.mxu0 0
    %703 = vmatprep.subr.bf16.mxu0 0
    %704 = vmatpush1.bf16.msra.mxu0 0
    %705 = vmatprep.subr.bf16.mxu0 0
    %706 = vmatpush1.bf16.msra.mxu0 0
    %707 = vmatprep.subr.bf16.mxu0 0
    %708 = vmatpush1.bf16.msra.mxu0 0
    %709 = vmatprep.subr.bf16.mxu0 0
    %710 = vmatpush1.bf16.msra.mxu0 0
    %711 = vmatprep.subr.bf16.mxu0 0
    %712 = vmatpush1.bf16.msra.mxu0 0
    %713 = vmatprep.subr.bf16.mxu0 0
    %714 = vmatpush1.bf16.msra.mxu0 0
    %715 = vmatprep.subr.bf16.mxu0 0
    %716 = vmatpush1.bf16.msra.mxu0 0
    %717 = vmatprep.subr.bf16.mxu0 0
    %718 = vmatpush1.bf16.msra.mxu0 0
    %719 = vmatprep.mubr.bf16.mxu0 0
    %720 = vmatmul.mubr.bf16.gmra.mrb[0].mxu0 %v685
    %v721 = vpop.f32.mrb[0].mxu0
    %v722 = vadd.f32 0.0, %v721
    %v723 = vpop.f32.mrb[0].mxu0
    %v724 = vpop.f32.mrb[0].mxu0
    %v725 = vpop.f32.mrb[0].mxu0
    %726 = vdwg.mxu0
    %728 = vrot.lane.b32.xlu0 %v679, 32
    %v729 = vpop.permute.xlu0 %728
    %v731 = vsel %vm213, %v729, 0
    %733 = vmatprep.subr.bf16.mxu0 0
    %734 = vmatpush1.bf16.msra.mxu0 %v348
    %735 = vmatprep.subr.bf16.mxu0 0
    %736 = vmatpush1.bf16.msra.mxu0 %v349
    %737 = vmatprep.subr.bf16.mxu0 0
    %738 = vmatpush1.bf16.msra.mxu0 0
    %739 = vmatprep.subr.bf16.mxu0 0
    %740 = vmatpush1.bf16.msra.mxu0 0
    %741 = vmatprep.subr.bf16.mxu0 0
    %742 = vmatpush1.bf16.msra.mxu0 0
    %743 = vmatprep.subr.bf16.mxu0 0
    %744 = vmatpush1.bf16.msra.mxu0 0
    %745 = vmatprep.subr.bf16.mxu0 0
    %746 = vmatpush1.bf16.msra.mxu0 0
    %747 = vmatprep.subr.bf16.mxu0 0
    %748 = vmatpush1.bf16.msra.mxu0 0
    %749 = vmatprep.subr.bf16.mxu0 0
    %750 = vmatpush1.bf16.msra.mxu0 0
    %751 = vmatprep.subr.bf16.mxu0 0
    %752 = vmatpush1.bf16.msra.mxu0 0
    %753 = vmatprep.subr.bf16.mxu0 0
    %754 = vmatpush1.bf16.msra.mxu0 0
    %755 = vmatprep.subr.bf16.mxu0 0
    %756 = vmatpush1.bf16.msra.mxu0 0
    %757 = vmatprep.subr.bf16.mxu0 0
    %758 = vmatpush1.bf16.msra.mxu0 0
    %759 = vmatprep.subr.bf16.mxu0 0
    %760 = vmatpush1.bf16.msra.mxu0 0
    %761 = vmatprep.subr.bf16.mxu0 0
    %762 = vmatpush1.bf16.msra.mxu0 0
    %763 = vmatprep.subr.bf16.mxu0 0
    %764 = vmatpush1.bf16.msra.mxu0 0
    %765 = vmatprep.mubr.bf16.mxu0 0
    %766 = vmatmul.mubr.bf16.gmra.mrb[0].mxu0 %v731
    %v767 = vpop.f32.mrb[0].mxu0
    %v768 = vadd.f32 %v722, %v767
    %v769 = vpop.f32.mrb[0].mxu0
    %v770 = vpop.f32.mrb[0].mxu0
    %v771 = vpop.f32.mrb[0].mxu0
    %772 = vdwg.mxu0
    %v773 = vadd.f32 %v768, %v190
    %v774 = vmul.f32 %v773, %v199
    %v775 = vxor.u32 %v774, 2147483648
    %v776 = vmul.f32 %v775, 1.442695
    %v777 = vpow.pop %v776
    %v778 = vadd.f32 %v777, 1.0
    %v779 = vrcp.pop %v778
    %v780 = vmul.f32 1.0, %v779
    %v781 = vmul.f32 %v780, 2.0
    %v782 = vsub.f32 %v781, 1.0
    %v783 = vmul.f32 %v780, %v604
    %785 = vrot.lane.b32.xlu0 %v782, 64
    %v786 = vpop.permute.xlu0 %785
    %v788 = vmul.f32 %v780, %v786
    %790 = vrot.lane.b32.xlu0 %v788, 32
    %v791 = vpop.permute.xlu0 %790
    %v793 = vadd.f32 %v783, %v791
    %v794 = vtanh.pop %v793
    %796 = vrot.lane.b32.xlu0 %v794, 64
    %v797 = vpop.permute.xlu0 %796
    %v799 = vmul.f32 %v780, %v797
    %v800 = vld [vmem:[#allocation2 + $0x18] sm:$0xff]
    %801 = vmatprep.subr.bf16.mxu0 0
    %802 = vmatpush1.bf16.msra.mxu0 %v209
    %803 = vmatprep.subr.bf16.mxu0 0
    %804 = vmatpush1.bf16.msra.mxu0 %v210
    %805 = vmatprep.subr.bf16.mxu0 0
    %806 = vmatpush1.bf16.msra.mxu0 0
    %807 = vmatprep.subr.bf16.mxu0 0
    %808 = vmatpush1.bf16.msra.mxu0 0
    %809 = vmatprep.subr.bf16.mxu0 0
    %810 = vmatpush1.bf16.msra.mxu0 0
    %811 = vmatprep.subr.bf16.mxu0 0
    %812 = vmatpush1.bf16.msra.mxu0 0
    %813 = vmatprep.subr.bf16.mxu0 0
    %814 = vmatpush1.bf16.msra.mxu0 0
    %815 = vmatprep.subr.bf16.mxu0 0
    %816 = vmatpush1.bf16.msra.mxu0 0
    %817 = vmatprep.subr.bf16.mxu0 0
    %818 = vmatpush1.bf16.msra.mxu0 0
    %819 = vmatprep.subr.bf16.mxu0 0
    %820 = vmatpush1.bf16.msra.mxu0 0
    %821 = vmatprep.subr.bf16.mxu0 0
    %822 = vmatpush1.bf16.msra.mxu0 0
    %823 = vmatprep.subr.bf16.mxu0 0
    %824 = vmatpush1.bf16.msra.mxu0 0
    %825 = vmatprep.subr.bf16.mxu0 0
    %826 = vmatpush1.bf16.msra.mxu0 0
    %827 = vmatprep.subr.bf16.mxu0 0
    %828 = vmatpush1.bf16.msra.mxu0 0
    %829 = vmatprep.subr.bf16.mxu0 0
    %830 = vmatpush1.bf16.msra.mxu0 0
    %831 = vmatprep.subr.bf16.mxu0 0
    %832 = vmatpush1.bf16.msra.mxu0 0
    %833 = vmatprep.mubr.bf16.mxu0 0
    %834 = vmatmul.mubr.bf16.gmra.mrb[0].mxu0 %v731
    %v835 = vpop.f32.mrb[0].mxu0
    %v836 = vadd.f32 0.0, %v835
    %v837 = vpop.f32.mrb[0].mxu0
    %v838 = vpop.f32.mrb[0].mxu0
    %v839 = vpop.f32.mrb[0].mxu0
    %840 = vdwg.mxu0
    %v841 = vadd.f32 %v800, %v836
    %v842 = vmul.f32 %v841, %v199
    %v843 = vxor.u32 %v842, 2147483648
    %v844 = vmul.f32 %v843, 1.442695
    %v845 = vpow.pop %v844
    %v846 = vadd.f32 %v845, 1.0
    %v847 = vrcp.pop %v846
    %v848 = vmul.f32 1.0, %v847
    %v849 = vmul.f32 %v848, 2.0
    %v850 = vsub.f32 %v849, 1.0
    %v851 = vmul.f32 %v848, %v672
    %853 = vrot.lane.b32.xlu0 %v850, 64
    %v854 = vpop.permute.xlu0 %853
    %v856 = vmul.f32 %v848, %v854
    %858 = vrot.lane.b32.xlu0 %v856, 32
    %v859 = vpop.permute.xlu0 %858
    %v861 = vadd.f32 %v851, %v859
    %v862 = vtanh.pop %v861
    %864 = vrot.lane.b32.xlu0 %v862, 64
    %v865 = vpop.permute.xlu0 %864
    %v867 = vmul.f32 %v848, %v865
    %v868 = vpack.c.bf16 %v867, %v867
    %v869 = vpack.c.bf16 %v799, %v799
    %871 = vrot.lane.b32.xlu0 %v869, 32
    %v872 = vpop.permute.xlu0 %871
    %v874 = vsel %vm213, %v872, 0
    %876 = vmatprep.subr.bf16.mxu0 0
    %877 = vmatpush1.bf16.msra.mxu0 %v293
    %878 = vmatprep.subr.bf16.mxu0 0
    %879 = vmatpush1.bf16.msra.mxu0 %v294
    %880 = vmatprep.subr.bf16.mxu0 0
    %881 = vmatpush1.bf16.msra.mxu0 0
    %882 = vmatprep.subr.bf16.mxu0 0
    %883 = vmatpush1.bf16.msra.mxu0 0
    %884 = vmatprep.subr.bf16.mxu0 0
    %885 = vmatpush1.bf16.msra.mxu0 0
    %886 = vmatprep.subr.bf16.mxu0 0
    %887 = vmatpush1.bf16.msra.mxu0 0
    %888 = vmatprep.subr.bf16.mxu0 0
    %889 = vmatpush1.bf16.msra.mxu0 0
    %890 = vmatprep.subr.bf16.mxu0 0
    %891 = vmatpush1.bf16.msra.mxu0 0
    %892 = vmatprep.subr.bf16.mxu0 0
    %893 = vmatpush1.bf16.msra.mxu0 0
    %894 = vmatprep.subr.bf16.mxu0 0
    %895 = vmatpush1.bf16.msra.mxu0 0
    %896 = vmatprep.subr.bf16.mxu0 0
    %897 = vmatpush1.bf16.msra.mxu0 0
    %898 = vmatprep.subr.bf16.mxu0 0
    %899 = vmatpush1.bf16.msra.mxu0 0
    %900 = vmatprep.subr.bf16.mxu0 0
    %901 = vmatpush1.bf16.msra.mxu0 0
    %902 = vmatprep.subr.bf16.mxu0 0
    %903 = vmatpush1.bf16.msra.mxu0 0
    %904 = vmatprep.subr.bf16.mxu0 0
    %905 = vmatpush1.bf16.msra.mxu0 0
    %906 = vmatprep.subr.bf16.mxu0 0
    %907 = vmatpush1.bf16.msra.mxu0 0
    %908 = vmatprep.mubr.bf16.mxu0 0
    %909 = vmatmul.mubr.bf16.gmra.mrb[0].mxu0 %v874
    %v910 = vpop.f32.mrb[0].mxu0
    %v911 = vadd.f32 0.0, %v910
    %v912 = vpop.f32.mrb[0].mxu0
    %v913 = vpop.f32.mrb[0].mxu0
    %v914 = vpop.f32.mrb[0].mxu0
    %915 = vdwg.mxu0
    %917 = vrot.lane.b32.xlu0 %v868, 32
    %v918 = vpop.permute.xlu0 %917
    %v920 = vsel %vm213, %v918, 0
    %922 = vmatprep.subr.bf16.mxu0 0
    %923 = vmatpush1.bf16.msra.mxu0 %v348
    %924 = vmatprep.subr.bf16.mxu0 0
    %925 = vmatpush1.bf16.msra.mxu0 %v349
    %926 = vmatprep.subr.bf16.mxu0 0
    %927 = vmatpush1.bf16.msra.mxu0 0
    %928 = vmatprep.subr.bf16.mxu0 0
    %929 = vmatpush1.bf16.msra.mxu0 0
    %930 = vmatprep.subr.bf16.mxu0 0
    %931 = vmatpush1.bf16.msra.mxu0 0
    %932 = vmatprep.subr.bf16.mxu0 0
    %933 = vmatpush1.bf16.msra.mxu0 0
    %934 = vmatprep.subr.bf16.mxu0 0
    %935 = vmatpush1.bf16.msra.mxu0 0
    %936 = vmatprep.subr.bf16.mxu0 0
    %937 = vmatpush1.bf16.msra.mxu0 0
    %938 = vmatprep.subr.bf16.mxu0 0
    %939 = vmatpush1.bf16.msra.mxu0 0
    %940 = vmatprep.subr.bf16.mxu0 0
    %941 = vmatpush1.bf16.msra.mxu0 0
    %942 = vmatprep.subr.bf16.mxu0 0
    %943 = vmatpush1.bf16.msra.mxu0 0
    %944 = vmatprep.subr.bf16.mxu0 0
    %945 = vmatpush1.bf16.msra.mxu0 0
    %946 = vmatprep.subr.bf16.mxu0 0
    %947 = vmatpush1.bf16.msra.mxu0 0
    %948 = vmatprep.subr.bf16.mxu0 0
    %949 = vmatpush1.bf16.msra.mxu0 0
    %950 = vmatprep.subr.bf16.mxu0 0
    %951 = vmatpush1.bf16.msra.mxu0 0
    %952 = vmatprep.subr.bf16.mxu0 0
    %953 = vmatpush1.bf16.msra.mxu0 0
    %954 = vmatprep.mubr.bf16.mxu0 0
    %955 = vmatmul.mubr.bf16.gmra.mrb[0].mxu0 %v920
    %v956 = vpop.f32.mrb[0].mxu0
    %v957 = vadd.f32 %v911, %v956
    %v958 = vpop.f32.mrb[0].mxu0
    %v959 = vpop.f32.mrb[0].mxu0
    %v960 = vpop.f32.mrb[0].mxu0
    %961 = vdwg.mxu0
    %v962 = vadd.f32 %v957, %v190
    %v963 = vmul.f32 %v962, %v199
    %v964 = vxor.u32 %v963, 2147483648
    %v965 = vmul.f32 %v964, 1.442695
    %v966 = vpow.pop %v965
    %v967 = vadd.f32 %v966, 1.0
    %v968 = vrcp.pop %v967
    %v969 = vmul.f32 1.0, %v968
    %v970 = vmul.f32 %v969, 2.0
    %v971 = vsub.f32 %v970, 1.0
    %v972 = vmul.f32 %v969, %v793
    %974 = vrot.lane.b32.xlu0 %v971, 64
    %v975 = vpop.permute.xlu0 %974
    %v977 = vmul.f32 %v969, %v975
    %979 = vrot.lane.b32.xlu0 %v977, 32
    %v980 = vpop.permute.xlu0 %979
    %v982 = vadd.f32 %v972, %v980
    %v983 = vtanh.pop %v982
    %985 = vrot.lane.b32.xlu0 %v983, 64
    %v986 = vpop.permute.xlu0 %985
    %v988 = vmul.f32 %v969, %v986
    %v989 = vld [vmem:[#allocation2 + $0x20] sm:$0xff]
    %990 = vmatprep.subr.bf16.mxu0 0
    %991 = vmatpush1.bf16.msra.mxu0 %v209
    %992 = vmatprep.subr.bf16.mxu0 0
    %993 = vmatpush1.bf16.msra.mxu0 %v210
    %994 = vmatprep.subr.bf16.mxu0 0
    %995 = vmatpush1.bf16.msra.mxu0 0
    %996 = vmatprep.subr.bf16.mxu0 0
    %997 = vmatpush1.bf16.msra.mxu0 0
    %998 = vmatprep.subr.bf16.mxu0 0
    %999 = vmatpush1.bf16.msra.mxu0 0
    %1000 = vmatprep.subr.bf16.mxu0 0
    %1001 = vmatpush1.bf16.msra.mxu0 0
    %1002 = vmatprep.subr.bf16.mxu0 0
    %1003 = vmatpush1.bf16.msra.mxu0 0
    %1004 = vmatprep.subr.bf16.mxu0 0
    %1005 = vmatpush1.bf16.msra.mxu0 0
    %1006 = vmatprep.subr.bf16.mxu0 0
    %1007 = vmatpush1.bf16.msra.mxu0 0
    %1008 = vmatprep.subr.bf16.mxu0 0
    %1009 = vmatpush1.bf16.msra.mxu0 0
    %1010 = vmatprep.subr.bf16.mxu0 0
    %1011 = vmatpush1.bf16.msra.mxu0 0
    %1012 = vmatprep.subr.bf16.mxu0 0
    %1013 = vmatpush1.bf16.msra.mxu0 0
    %1014 = vmatprep.subr.bf16.mxu0 0
    %1015 = vmatpush1.bf16.msra.mxu0 0
    %1016 = vmatprep.subr.bf16.mxu0 0
    %1017 = vmatpush1.bf16.msra.mxu0 0
    %1018 = vmatprep.subr.bf16.mxu0 0
    %1019 = vmatpush1.bf16.msra.mxu0 0
    %1020 = vmatprep.subr.bf16.mxu0 0
    %1021 = vmatpush1.bf16.msra.mxu0 0
    %1022 = vmatprep.mubr.bf16.mxu0 0
    %1023 = vmatmul.mubr.bf16.gmra.mrb[0].mxu0 %v920
    %v1024 = vpop.f32.mrb[0].mxu0
    %v1025 = vadd.f32 0.0, %v1024
    %v1026 = vpop.f32.mrb[0].mxu0
    %v1027 = vpop.f32.mrb[0].mxu0
    %v1028 = vpop.f32.mrb[0].mxu0
    %1029 = vdwg.mxu0
    %v1030 = vadd.f32 %v989, %v1025
    %v1031 = vmul.f32 %v1030, %v199
    %v1032 = vxor.u32 %v1031, 2147483648
    %v1033 = vmul.f32 %v1032, 1.442695
    %v1034 = vpow.pop %v1033
    %v1035 = vadd.f32 %v1034, 1.0
    %v1036 = vrcp.pop %v1035
    %v1037 = vmul.f32 1.0, %v1036
    %v1038 = vmul.f32 %v1037, 2.0
    %v1039 = vsub.f32 %v1038, 1.0
    %v1040 = vmul.f32 %v1037, %v861
    %1042 = vrot.lane.b32.xlu0 %v1039, 64
    %v1043 = vpop.permute.xlu0 %1042
    %v1045 = vmul.f32 %v1037, %v1043
    %1047 = vrot.lane.b32.xlu0 %v1045, 32
    %v1048 = vpop.permute.xlu0 %1047
    %v1050 = vadd.f32 %v1040, %v1048
    %v1051 = vtanh.pop %v1050
    %1053 = vrot.lane.b32.xlu0 %v1051, 64
    %v1054 = vpop.permute.xlu0 %1053
    %v1056 = vmul.f32 %v1037, %v1054
    %v1057 = vpack.c.bf16 %v1056, %v1056
    %v1058 = vpack.c.bf16 %v988, %v988
    %1060 = vrot.lane.b32.xlu0 %v1058, 32
    %v1061 = vpop.permute.xlu0 %1060
    %v1063 = vsel %vm213, %v1061, 0
    %1065 = vmatprep.subr.bf16.mxu0 0
    %1066 = vmatpush1.bf16.msra.mxu0 %v293
    %1067 = vmatprep.subr.bf16.mxu0 0
    %1068 = vmatpush1.bf16.msra.mxu0 %v294
    %1069 = vmatprep.subr.bf16.mxu0 0
    %1070 = vmatpush1.bf16.msra.mxu0 0
    %1071 = vmatprep.subr.bf16.mxu0 0
    %1072 = vmatpush1.bf16.msra.mxu0 0
    %1073 = vmatprep.subr.bf16.mxu0 0
    %1074 = vmatpush1.bf16.msra.mxu0 0
    %1075 = vmatprep.subr.bf16.mxu0 0
    %1076 = vmatpush1.bf16.msra.mxu0 0
    %1077 = vmatprep.subr.bf16.mxu0 0
    %1078 = vmatpush1.bf16.msra.mxu0 0
    %1079 = vmatprep.subr.bf16.mxu0 0
    %1080 = vmatpush1.bf16.msra.mxu0 0
    %1081 = vmatprep.subr.bf16.mxu0 0
    %1082 = vmatpush1.bf16.msra.mxu0 0
    %1083 = vmatprep.subr.bf16.mxu0 0
    %1084 = vmatpush1.bf16.msra.mxu0 0
    %1085 = vmatprep.subr.bf16.mxu0 0
    %1086 = vmatpush1.bf16.msra.mxu0 0
    %1087 = vmatprep.subr.bf16.mxu0 0
    %1088 = vmatpush1.bf16.msra.mxu0 0
    %1089 = vmatprep.subr.bf16.mxu0 0
    %1090 = vmatpush1.bf16.msra.mxu0 0
    %1091 = vmatprep.subr.bf16.mxu0 0
    %1092 = vmatpush1.bf16.msra.mxu0 0
    %1093 = vmatprep.subr.bf16.mxu0 0
    %1094 = vmatpush1.bf16.msra.mxu0 0
    %1095 = vmatprep.subr.bf16.mxu0 0
    %1096 = vmatpush1.bf16.msra.mxu0 0
    %1097 = vmatprep.mubr.bf16.mxu0 0
    %1098 = vmatmul.mubr.bf16.gmra.mrb[0].mxu0 %v1063
    %v1099 = vpop.f32.mrb[0].mxu0
    %v1100 = vadd.f32 0.0, %v1099
    %v1101 = vpop.f32.mrb[0].mxu0
    %v1102 = vpop.f32.mrb[0].mxu0
    %v1103 = vpop.f32.mrb[0].mxu0
    %1104 = vdwg.mxu0
    %1106 = vrot.lane.b32.xlu0 %v1057, 32
    %v1107 = vpop.permute.xlu0 %1106
    %v1109 = vsel %vm213, %v1107, 0
    %1111 = vmatprep.subr.bf16.mxu0 0
    %1112 = vmatpush1.bf16.msra.mxu0 %v348
    %1113 = vmatprep.subr.bf16.mxu0 0
    %1114 = vmatpush1.bf16.msra.mxu0 %v349
    %1115 = vmatprep.subr.bf16.mxu0 0
    %1116 = vmatpush1.bf16.msra.mxu0 0
    %1117 = vmatprep.subr.bf16.mxu0 0
    %1118 = vmatpush1.bf16.msra.mxu0 0
    %1119 = vmatprep.subr.bf16.mxu0 0
    %1120 = vmatpush1.bf16.msra.mxu0 0
    %1121 = vmatprep.subr.bf16.mxu0 0
    %1122 = vmatpush1.bf16.msra.mxu0 0
    %1123 = vmatprep.subr.bf16.mxu0 0
    %1124 = vmatpush1.bf16.msra.mxu0 0
    %1125 = vmatprep.subr.bf16.mxu0 0
    %1126 = vmatpush1.bf16.msra.mxu0 0
    %1127 = vmatprep.subr.bf16.mxu0 0
    %1128 = vmatpush1.bf16.msra.mxu0 0
    %1129 = vmatprep.subr.bf16.mxu0 0
    %1130 = vmatpush1.bf16.msra.mxu0 0
    %1131 = vmatprep.subr.bf16.mxu0 0
    %1132 = vmatpush1.bf16.msra.mxu0 0
    %1133 = vmatprep.subr.bf16.mxu0 0
    %1134 = vmatpush1.bf16.msra.mxu0 0
    %1135 = vmatprep.subr.bf16.mxu0 0
    %1136 = vmatpush1.bf16.msra.mxu0 0
    %1137 = vmatprep.subr.bf16.mxu0 0
    %1138 = vmatpush1.bf16.msra.mxu0 0
    %1139 = vmatprep.subr.bf16.mxu0 0
    %1140 = vmatpush1.bf16.msra.mxu0 0
    %1141 = vmatprep.subr.bf16.mxu0 0
    %1142 = vmatpush1.bf16.msra.mxu0 0
    %1143 = vmatprep.mubr.bf16.mxu0 0
    %1144 = vmatmul.mubr.bf16.gmra.mrb[0].mxu0 %v1109
    %v1145 = vpop.f32.mrb[0].mxu0
    %v1146 = vadd.f32 %v1100, %v1145
    %v1147 = vpop.f32.mrb[0].mxu0
    %v1148 = vpop.f32.mrb[0].mxu0
    %v1149 = vpop.f32.mrb[0].mxu0
    %1150 = vdwg.mxu0
    %v1151 = vadd.f32 %v1146, %v190
    %v1152 = vmul.f32 %v1151, %v199
    %v1153 = vxor.u32 %v1152, 2147483648
    %v1154 = vmul.f32 %v1153, 1.442695
    %v1155 = vpow.pop %v1154
    %v1156 = vadd.f32 %v1155, 1.0
    %v1157 = vrcp.pop %v1156
    %v1158 = vmul.f32 1.0, %v1157
    %v1159 = vmul.f32 %v1158, 2.0
    %v1160 = vsub.f32 %v1159, 1.0
    %v1161 = vmul.f32 %v1158, %v982
    %1163 = vrot.lane.b32.xlu0 %v1160, 64
    %v1164 = vpop.permute.xlu0 %1163
    %v1166 = vmul.f32 %v1158, %v1164
    %1168 = vrot.lane.b32.xlu0 %v1166, 32
    %v1169 = vpop.permute.xlu0 %1168
    %v1171 = vadd.f32 %v1161, %v1169
    %v1172 = vtanh.pop %v1171
    %1174 = vrot.lane.b32.xlu0 %v1172, 64
    %v1175 = vpop.permute.xlu0 %1174
    %v1177 = vmul.f32 %v1158, %v1175
    %v1178 = vld [vmem:[#allocation2 + $0x28] sm:$0xff]
    %1179 = vmatprep.subr.bf16.mxu0 0
    %1180 = vmatpush1.bf16.msra.mxu0 %v209
    %1181 = vmatprep.subr.bf16.mxu0 0
    %1182 = vmatpush1.bf16.msra.mxu0 %v210
    %1183 = vmatprep.subr.bf16.mxu0 0
    %1184 = vmatpush1.bf16.msra.mxu0 0
    %1185 = vmatprep.subr.bf16.mxu0 0
    %1186 = vmatpush1.bf16.msra.mxu0 0
    %1187 = vmatprep.subr.bf16.mxu0 0
    %1188 = vmatpush1.bf16.msra.mxu0 0
    %1189 = vmatprep.subr.bf16.mxu0 0
    %1190 = vmatpush1.bf16.msra.mxu0 0
    %1191 = vmatprep.subr.bf16.mxu0 0
    %1192 = vmatpush1.bf16.msra.mxu0 0
    %1193 = vmatprep.subr.bf16.mxu0 0
    %1194 = vmatpush1.bf16.msra.mxu0 0
    %1195 = vmatprep.subr.bf16.mxu0 0
    %1196 = vmatpush1.bf16.msra.mxu0 0
    %1197 = vmatprep.subr.bf16.mxu0 0
    %1198 = vmatpush1.bf16.msra.mxu0 0
    %1199 = vmatprep.subr.bf16.mxu0 0
    %1200 = vmatpush1.bf16.msra.mxu0 0
    %1201 = vmatprep.subr.bf16.mxu0 0
    %1202 = vmatpush1.bf16.msra.mxu0 0
    %1203 = vmatprep.subr.bf16.mxu0 0
    %1204 = vmatpush1.bf16.msra.mxu0 0
    %1205 = vmatprep.subr.bf16.mxu0 0
    %1206 = vmatpush1.bf16.msra.mxu0 0
    %1207 = vmatprep.subr.bf16.mxu0 0
    %1208 = vmatpush1.bf16.msra.mxu0 0
    %1209 = vmatprep.subr.bf16.mxu0 0
    %1210 = vmatpush1.bf16.msra.mxu0 0
    %1211 = vmatprep.mubr.bf16.mxu0 0
    %1212 = vmatmul.mubr.bf16.gmra.mrb[0].mxu0 %v1109
    %v1213 = vpop.f32.mrb[0].mxu0
    %v1214 = vadd.f32 0.0, %v1213
    %v1215 = vpop.f32.mrb[0].mxu0
    %v1216 = vpop.f32.mrb[0].mxu0
    %v1217 = vpop.f32.mrb[0].mxu0
    %1218 = vdwg.mxu0
    %v1219 = vadd.f32 %v1178, %v1214
    %v1220 = vmul.f32 %v1219, %v199
    %v1221 = vxor.u32 %v1220, 2147483648
    %v1222 = vmul.f32 %v1221, 1.442695
    %v1223 = vpow.pop %v1222
    %v1224 = vadd.f32 %v1223, 1.0
    %v1225 = vrcp.pop %v1224
    %v1226 = vmul.f32 1.0, %v1225
    %v1227 = vmul.f32 %v1226, 2.0
    %v1228 = vsub.f32 %v1227, 1.0
    %v1229 = vmul.f32 %v1226, %v1050
    %1231 = vrot.lane.b32.xlu0 %v1228, 64
    %v1232 = vpop.permute.xlu0 %1231
    %v1234 = vmul.f32 %v1226, %v1232
    %1236 = vrot.lane.b32.xlu0 %v1234, 32
    %v1237 = vpop.permute.xlu0 %1236
    %v1239 = vadd.f32 %v1229, %v1237
    %v1240 = vtanh.pop %v1239
    %1242 = vrot.lane.b32.xlu0 %v1240, 64
    %v1243 = vpop.permute.xlu0 %1242
    %v1245 = vmul.f32 %v1226, %v1243
    %v1246 = vpack.c.bf16 %v1245, %v1245
    %v1247 = vpack.c.bf16 %v1177, %v1177
    %1249 = vrot.lane.b32.xlu0 %v1247, 32
    %v1250 = vpop.permute.xlu0 %1249
    %v1252 = vsel %vm213, %v1250, 0
    %1254 = vmatprep.subr.bf16.mxu0 0
    %1255 = vmatpush1.bf16.msra.mxu0 %v293
    %1256 = vmatprep.subr.bf16.mxu0 0
    %1257 = vmatpush1.bf16.msra.mxu0 %v294
    %1258 = vmatprep.subr.bf16.mxu0 0
    %1259 = vmatpush1.bf16.msra.mxu0 0
    %1260 = vmatprep.subr.bf16.mxu0 0
    %1261 = vmatpush1.bf16.msra.mxu0 0
    %1262 = vmatprep.subr.bf16.mxu0 0
    %1263 = vmatpush1.bf16.msra.mxu0 0
    %1264 = vmatprep.subr.bf16.mxu0 0
    %1265 = vmatpush1.bf16.msra.mxu0 0
    %1266 = vmatprep.subr.bf16.mxu0 0
    %1267 = vmatpush1.bf16.msra.mxu0 0
    %1268 = vmatprep.subr.bf16.mxu0 0
    %1269 = vmatpush1.bf16.msra.mxu0 0
    %1270 = vmatprep.subr.bf16.mxu0 0
    %1271 = vmatpush1.bf16.msra.mxu0 0
    %1272 = vmatprep.subr.bf16.mxu0 0
    %1273 = vmatpush1.bf16.msra.mxu0 0
    %1274 = vmatprep.subr.bf16.mxu0 0
    %1275 = vmatpush1.bf16.msra.mxu0 0
    %1276 = vmatprep.subr.bf16.mxu0 0
    %1277 = vmatpush1.bf16.msra.mxu0 0
    %1278 = vmatprep.subr.bf16.mxu0 0
    %1279 = vmatpush1.bf16.msra.mxu0 0
    %1280 = vmatprep.subr.bf16.mxu0 0
    %1281 = vmatpush1.bf16.msra.mxu0 0
    %1282 = vmatprep.subr.bf16.mxu0 0
    %1283 = vmatpush1.bf16.msra.mxu0 0
    %1284 = vmatprep.subr.bf16.mxu0 0
    %1285 = vmatpush1.bf16.msra.mxu0 0
    %1286 = vmatprep.mubr.bf16.mxu0 0
    %1287 = vmatmul.mubr.bf16.gmra.mrb[0].mxu0 %v1252
    %v1288 = vpop.f32.mrb[0].mxu0
    %v1289 = vadd.f32 0.0, %v1288
    %v1290 = vpop.f32.mrb[0].mxu0
    %v1291 = vpop.f32.mrb[0].mxu0
    %v1292 = vpop.f32.mrb[0].mxu0
    %1293 = vdwg.mxu0
    %1295 = vrot.lane.b32.xlu0 %v1246, 32
    %v1296 = vpop.permute.xlu0 %1295
    %v1298 = vsel %vm213, %v1296, 0
    %1300 = vmatprep.subr.bf16.mxu0 0
    %1301 = vmatpush1.bf16.msra.mxu0 %v348
    %1302 = vmatprep.subr.bf16.mxu0 0
    %1303 = vmatpush1.bf16.msra.mxu0 %v349
    %1304 = vmatprep.subr.bf16.mxu0 0
    %1305 = vmatpush1.bf16.msra.mxu0 0
    %1306 = vmatprep.subr.bf16.mxu0 0
    %1307 = vmatpush1.bf16.msra.mxu0 0
    %1308 = vmatprep.subr.bf16.mxu0 0
    %1309 = vmatpush1.bf16.msra.mxu0 0
    %1310 = vmatprep.subr.bf16.mxu0 0
    %1311 = vmatpush1.bf16.msra.mxu0 0
    %1312 = vmatprep.subr.bf16.mxu0 0
    %1313 = vmatpush1.bf16.msra.mxu0 0
    %1314 = vmatprep.subr.bf16.mxu0 0
    %1315 = vmatpush1.bf16.msra.mxu0 0
    %1316 = vmatprep.subr.bf16.mxu0 0
    %1317 = vmatpush1.bf16.msra.mxu0 0
    %1318 = vmatprep.subr.bf16.mxu0 0
    %1319 = vmatpush1.bf16.msra.mxu0 0
    %1320 = vmatprep.subr.bf16.mxu0 0
    %1321 = vmatpush1.bf16.msra.mxu0 0
    %1322 = vmatprep.subr.bf16.mxu0 0
    %1323 = vmatpush1.bf16.msra.mxu0 0
    %1324 = vmatprep.subr.bf16.mxu0 0
    %1325 = vmatpush1.bf16.msra.mxu0 0
    %1326 = vmatprep.subr.bf16.mxu0 0
    %1327 = vmatpush1.bf16.msra.mxu0 0
    %1328 = vmatprep.subr.bf16.mxu0 0
    %1329 = vmatpush1.bf16.msra.mxu0 0
    %1330 = vmatprep.subr.bf16.mxu0 0
    %1331 = vmatpush1.bf16.msra.mxu0 0
    %1332 = vmatprep.mubr.bf16.mxu0 0
    %1333 = vmatmul.mubr.bf16.gmra.mrb[0].mxu0 %v1298
    %v1334 = vpop.f32.mrb[0].mxu0
    %v1335 = vadd.f32 %v1289, %v1334
    %v1336 = vpop.f32.mrb[0].mxu0
    %v1337 = vpop.f32.mrb[0].mxu0
    %v1338 = vpop.f32.mrb[0].mxu0
    %1339 = vdwg.mxu0
    %v1340 = vadd.f32 %v1335, %v190
    %v1341 = vmul.f32 %v1340, %v199
    %v1342 = vxor.u32 %v1341, 2147483648
    %v1343 = vmul.f32 %v1342, 1.442695
    %v1344 = vpow.pop %v1343
    %v1345 = vadd.f32 %v1344, 1.0
    %v1346 = vrcp.pop %v1345
    %v1347 = vmul.f32 1.0, %v1346
    %v1348 = vmul.f32 %v1347, 2.0
    %v1349 = vsub.f32 %v1348, 1.0
    %v1350 = vmul.f32 %v1347, %v1171
    %1352 = vrot.lane.b32.xlu0 %v1349, 64
    %v1353 = vpop.permute.xlu0 %1352
    %v1355 = vmul.f32 %v1347, %v1353
    %1357 = vrot.lane.b32.xlu0 %v1355, 32
    %v1358 = vpop.permute.xlu0 %1357
    %v1360 = vadd.f32 %v1350, %v1358
    %v1361 = vtanh.pop %v1360
    %1363 = vrot.lane.b32.xlu0 %v1361, 64
    %v1364 = vpop.permute.xlu0 %1363
    %v1366 = vmul.f32 %v1347, %v1364
    %v1367 = vld [vmem:[#allocation2 + $0x30] sm:$0xff]
    %1368 = vmatprep.subr.bf16.mxu0 0
    %1369 = vmatpush1.bf16.msra.mxu0 %v209
    %1370 = vmatprep.subr.bf16.mxu0 0
    %1371 = vmatpush1.bf16.msra.mxu0 %v210
    %1372 = vmatprep.subr.bf16.mxu0 0
    %1373 = vmatpush1.bf16.msra.mxu0 0
    %1374 = vmatprep.subr.bf16.mxu0 0
    %1375 = vmatpush1.bf16.msra.mxu0 0
    %1376 = vmatprep.subr.bf16.mxu0 0
    %1377 = vmatpush1.bf16.msra.mxu0 0
    %1378 = vmatprep.subr.bf16.mxu0 0
    %1379 = vmatpush1.bf16.msra.mxu0 0
    %1380 = vmatprep.subr.bf16.mxu0 0
    %1381 = vmatpush1.bf16.msra.mxu0 0
    %1382 = vmatprep.subr.bf16.mxu0 0
    %1383 = vmatpush1.bf16.msra.mxu0 0
    %1384 = vmatprep.subr.bf16.mxu0 0
    %1385 = vmatpush1.bf16.msra.mxu0 0
    %1386 = vmatprep.subr.bf16.mxu0 0
    %1387 = vmatpush1.bf16.msra.mxu0 0
    %1388 = vmatprep.subr.bf16.mxu0 0
    %1389 = vmatpush1.bf16.msra.mxu0 0
    %1390 = vmatprep.subr.bf16.mxu0 0
    %1391 = vmatpush1.bf16.msra.mxu0 0
    %1392 = vmatprep.subr.bf16.mxu0 0
    %1393 = vmatpush1.bf16.msra.mxu0 0
    %1394 = vmatprep.subr.bf16.mxu0 0
    %1395 = vmatpush1.bf16.msra.mxu0 0
    %1396 = vmatprep.subr.bf16.mxu0 0
    %1397 = vmatpush1.bf16.msra.mxu0 0
    %1398 = vmatprep.subr.bf16.mxu0 0
    %1399 = vmatpush1.bf16.msra.mxu0 0
    %1400 = vmatprep.mubr.bf16.mxu0 0
    %1401 = vmatmul.mubr.bf16.gmra.mrb[0].mxu0 %v1298
    %v1402 = vpop.f32.mrb[0].mxu0
    %v1403 = vadd.f32 0.0, %v1402
    %v1404 = vpop.f32.mrb[0].mxu0
    %v1405 = vpop.f32.mrb[0].mxu0
    %v1406 = vpop.f32.mrb[0].mxu0
    %1407 = vdwg.mxu0
    %v1408 = vadd.f32 %v1367, %v1403
    %v1409 = vmul.f32 %v1408, %v199
    %v1410 = vxor.u32 %v1409, 2147483648
    %v1411 = vmul.f32 %v1410, 1.442695
    %v1412 = vpow.pop %v1411
    %v1413 = vadd.f32 %v1412, 1.0
    %v1414 = vrcp.pop %v1413
    %v1415 = vmul.f32 1.0, %v1414
    %v1416 = vmul.f32 %v1415, 2.0
    %v1417 = vsub.f32 %v1416, 1.0
    %v1418 = vmul.f32 %v1415, %v1239
    %1420 = vrot.lane.b32.xlu0 %v1417, 64
    %v1421 = vpop.permute.xlu0 %1420
    %v1423 = vmul.f32 %v1415, %v1421
    %1425 = vrot.lane.b32.xlu0 %v1423, 32
    %v1426 = vpop.permute.xlu0 %1425
    %v1428 = vadd.f32 %v1418, %v1426
    %v1429 = vtanh.pop %v1428
    %1431 = vrot.lane.b32.xlu0 %v1429, 64
    %v1432 = vpop.permute.xlu0 %1431
    %v1434 = vmul.f32 %v1415, %v1432
    %v1435 = vpack.c.bf16 %v1434, %v1434
    %v1436 = vpack.c.bf16 %v1366, %v1366
    %1438 = vrot.lane.b32.xlu0 %v1436, 32
    %v1439 = vpop.permute.xlu0 %1438
    %v1441 = vsel %vm213, %v1439, 0
    %1443 = vmatprep.subr.bf16.mxu0 0
    %1444 = vmatpush1.bf16.msra.mxu0 %v293
    %1445 = vmatprep.subr.bf16.mxu0 0
    %1446 = vmatpush1.bf16.msra.mxu0 %v294
    %1447 = vmatprep.subr.bf16.mxu0 0
    %1448 = vmatpush1.bf16.msra.mxu0 0
    %1449 = vmatprep.subr.bf16.mxu0 0
    %1450 = vmatpush1.bf16.msra.mxu0 0
    %1451 = vmatprep.subr.bf16.mxu0 0
    %1452 = vmatpush1.bf16.msra.mxu0 0
    %1453 = vmatprep.subr.bf16.mxu0 0
    %1454 = vmatpush1.bf16.msra.mxu0 0
    %1455 = vmatprep.subr.bf16.mxu0 0
    %1456 = vmatpush1.bf16.msra.mxu0 0
    %1457 = vmatprep.subr.bf16.mxu0 0
    %1458 = vmatpush1.bf16.msra.mxu0 0
    %1459 = vmatprep.subr.bf16.mxu0 0
    %1460 = vmatpush1.bf16.msra.mxu0 0
    %1461 = vmatprep.subr.bf16.mxu0 0
    %1462 = vmatpush1.bf16.msra.mxu0 0
    %1463 = vmatprep.subr.bf16.mxu0 0
    %1464 = vmatpush1.bf16.msra.mxu0 0
    %1465 = vmatprep.subr.bf16.mxu0 0
    %1466 = vmatpush1.bf16.msra.mxu0 0
    %1467 = vmatprep.subr.bf16.mxu0 0
    %1468 = vmatpush1.bf16.msra.mxu0 0
    %1469 = vmatprep.subr.bf16.mxu0 0
    %1470 = vmatpush1.bf16.msra.mxu0 0
    %1471 = vmatprep.subr.bf16.mxu0 0
    %1472 = vmatpush1.bf16.msra.mxu0 0
    %1473 = vmatprep.subr.bf16.mxu0 0
    %1474 = vmatpush1.bf16.msra.mxu0 0
    %1475 = vmatprep.mubr.bf16.mxu0 0
    %1476 = vmatmul.mubr.bf16.gmra.mrb[0].mxu0 %v1441
    %v1477 = vpop.f32.mrb[0].mxu0
    %v1478 = vadd.f32 0.0, %v1477
    %v1479 = vpop.f32.mrb[0].mxu0
    %v1480 = vpop.f32.mrb[0].mxu0
    %v1481 = vpop.f32.mrb[0].mxu0
    %1482 = vdwg.mxu0
    %1484 = vrot.lane.b32.xlu0 %v1435, 32
    %v1485 = vpop.permute.xlu0 %1484
    %v1487 = vsel %vm213, %v1485, 0
    %1489 = vmatprep.subr.bf16.mxu0 0
    %1490 = vmatpush1.bf16.msra.mxu0 %v348
    %1491 = vmatprep.subr.bf16.mxu0 0
    %1492 = vmatpush1.bf16.msra.mxu0 %v349
    %1493 = vmatprep.subr.bf16.mxu0 0
    %1494 = vmatpush1.bf16.msra.mxu0 0
    %1495 = vmatprep.subr.bf16.mxu0 0
    %1496 = vmatpush1.bf16.msra.mxu0 0
    %1497 = vmatprep.subr.bf16.mxu0 0
    %1498 = vmatpush1.bf16.msra.mxu0 0
    %1499 = vmatprep.subr.bf16.mxu0 0
    %1500 = vmatpush1.bf16.msra.mxu0 0
    %1501 = vmatprep.subr.bf16.mxu0 0
    %1502 = vmatpush1.bf16.msra.mxu0 0
    %1503 = vmatprep.subr.bf16.mxu0 0
    %1504 = vmatpush1.bf16.msra.mxu0 0
    %1505 = vmatprep.subr.bf16.mxu0 0
    %1506 = vmatpush1.bf16.msra.mxu0 0
    %1507 = vmatprep.subr.bf16.mxu0 0
    %1508 = vmatpush1.bf16.msra.mxu0 0
    %1509 = vmatprep.subr.bf16.mxu0 0
    %1510 = vmatpush1.bf16.msra.mxu0 0
    %1511 = vmatprep.subr.bf16.mxu0 0
    %1512 = vmatpush1.bf16.msra.mxu0 0
    %1513 = vmatprep.subr.bf16.mxu0 0
    %1514 = vmatpush1.bf16.msra.mxu0 0
    %1515 = vmatprep.subr.bf16.mxu0 0
    %1516 = vmatpush1.bf16.msra.mxu0 0
    %1517 = vmatprep.subr.bf16.mxu0 0
    %1518 = vmatpush1.bf16.msra.mxu0 0
    %1519 = vmatprep.subr.bf16.mxu0 0
    %1520 = vmatpush1.bf16.msra.mxu0 0
    %1521 = vmatprep.mubr.bf16.mxu0 0
    %1522 = vmatmul.mubr.bf16.gmra.mrb[0].mxu0 %v1487
    %v1523 = vpop.f32.mrb[0].mxu0
    %v1524 = vadd.f32 %v1478, %v1523
    %v1525 = vpop.f32.mrb[0].mxu0
    %v1526 = vpop.f32.mrb[0].mxu0
    %v1527 = vpop.f32.mrb[0].mxu0
    %1528 = vdwg.mxu0
    %v1529 = vadd.f32 %v1524, %v190
    %v1530 = vmul.f32 %v1529, %v199
    %v1531 = vxor.u32 %v1530, 2147483648
    %v1532 = vmul.f32 %v1531, 1.442695
    %v1533 = vpow.pop %v1532
    %v1534 = vadd.f32 %v1533, 1.0
    %v1535 = vrcp.pop %v1534
    %v1536 = vmul.f32 1.0, %v1535
    %v1537 = vmul.f32 %v1536, 2.0
    %v1538 = vsub.f32 %v1537, 1.0
    %v1539 = vmul.f32 %v1536, %v1360
    %1541 = vrot.lane.b32.xlu0 %v1538, 64
    %v1542 = vpop.permute.xlu0 %1541
    %v1544 = vmul.f32 %v1536, %v1542
    %1546 = vrot.lane.b32.xlu0 %v1544, 32
    %v1547 = vpop.permute.xlu0 %1546
    %v1549 = vadd.f32 %v1539, %v1547
    %v1550 = vtanh.pop %v1549
    %1552 = vrot.lane.b32.xlu0 %v1550, 64
    %v1553 = vpop.permute.xlu0 %1552
    %v1555 = vmul.f32 %v1536, %v1553
    %v1556 = vld [vmem:[#allocation2 + $0x38] sm:$0xff]
    %1557 = vmatprep.subr.bf16.mxu0 0
    %1558 = vmatpush1.bf16.msra.mxu0 %v209
    %1559 = vmatprep.subr.bf16.mxu0 0
    %1560 = vmatpush1.bf16.msra.mxu0 %v210
    %1561 = vmatprep.subr.bf16.mxu0 0
    %1562 = vmatpush1.bf16.msra.mxu0 0
    %1563 = vmatprep.subr.bf16.mxu0 0
    %1564 = vmatpush1.bf16.msra.mxu0 0
    %1565 = vmatprep.subr.bf16.mxu0 0
    %1566 = vmatpush1.bf16.msra.mxu0 0
    %1567 = vmatprep.subr.bf16.mxu0 0
    %1568 = vmatpush1.bf16.msra.mxu0 0
    %1569 = vmatprep.subr.bf16.mxu0 0
    %1570 = vmatpush1.bf16.msra.mxu0 0
    %1571 = vmatprep.subr.bf16.mxu0 0
    %1572 = vmatpush1.bf16.msra.mxu0 0
    %1573 = vmatprep.subr.bf16.mxu0 0
    %1574 = vmatpush1.bf16.msra.mxu0 0
    %1575 = vmatprep.subr.bf16.mxu0 0
    %1576 = vmatpush1.bf16.msra.mxu0 0
    %1577 = vmatprep.subr.bf16.mxu0 0
    %1578 = vmatpush1.bf16.msra.mxu0 0
    %1579 = vmatprep.subr.bf16.mxu0 0
    %1580 = vmatpush1.bf16.msra.mxu0 0
    %1581 = vmatprep.subr.bf16.mxu0 0
    %1582 = vmatpush1.bf16.msra.mxu0 0
    %1583 = vmatprep.subr.bf16.mxu0 0
    %1584 = vmatpush1.bf16.msra.mxu0 0
    %1585 = vmatprep.subr.bf16.mxu0 0
    %1586 = vmatpush1.bf16.msra.mxu0 0
    %1587 = vmatprep.subr.bf16.mxu0 0
    %1588 = vmatpush1.bf16.msra.mxu0 0
    %1589 = vmatprep.mubr.bf16.mxu0 0
    %1590 = vmatmul.mubr.bf16.gmra.mrb[0].mxu0 %v1487
    %v1591 = vpop.f32.mrb[0].mxu0
    %v1592 = vadd.f32 0.0, %v1591
    %v1593 = vpop.f32.mrb[0].mxu0
    %v1594 = vpop.f32.mrb[0].mxu0
    %v1595 = vpop.f32.mrb[0].mxu0
    %1596 = vdwg.mxu0
    %v1597 = vadd.f32 %v1556, %v1592
    %v1598 = vmul.f32 %v1597, %v199
    %v1599 = vxor.u32 %v1598, 2147483648
    %v1600 = vmul.f32 %v1599, 1.442695
    %v1601 = vpow.pop %v1600
    %v1602 = vadd.f32 %v1601, 1.0
    %v1603 = vrcp.pop %v1602
    %v1604 = vmul.f32 1.0, %v1603
    %v1605 = vmul.f32 %v1604, 2.0
    %v1606 = vsub.f32 %v1605, 1.0
    %v1607 = vmul.f32 %v1604, %v1428
    %1609 = vrot.lane.b32.xlu0 %v1606, 64
    %v1610 = vpop.permute.xlu0 %1609
    %v1612 = vmul.f32 %v1604, %v1610
    %1614 = vrot.lane.b32.xlu0 %v1612, 32
    %v1615 = vpop.permute.xlu0 %1614
    %v1617 = vadd.f32 %v1607, %v1615
    %v1618 = vtanh.pop %v1617
    %1620 = vrot.lane.b32.xlu0 %v1618, 64
    %v1621 = vpop.permute.xlu0 %1620
    %v1623 = vmul.f32 %v1604, %v1621
    %v1624 = vpack.c.bf16 %v1623, %v1623
    %v1625 = vpack.c.bf16 %v1555, %v1555
    %1627 = vrot.lane.b32.xlu0 %v1625, 32
    %v1628 = vpop.permute.xlu0 %1627
    %v1630 = vsel %vm213, %v1628, 0
    %1632 = vmatprep.subr.bf16.mxu0 0
    %1633 = vmatpush1.bf16.msra.mxu0 %v293
    %1634 = vmatprep.subr.bf16.mxu0 0
    %1635 = vmatpush1.bf16.msra.mxu0 %v294
    %1636 = vmatprep.subr.bf16.mxu0 0
    %1637 = vmatpush1.bf16.msra.mxu0 0
    %1638 = vmatprep.subr.bf16.mxu0 0
    %1639 = vmatpush1.bf16.msra.mxu0 0
    %1640 = vmatprep.subr.bf16.mxu0 0
    %1641 = vmatpush1.bf16.msra.mxu0 0
    %1642 = vmatprep.subr.bf16.mxu0 0
    %1643 = vmatpush1.bf16.msra.mxu0 0
    %1644 = vmatprep.subr.bf16.mxu0 0
    %1645 = vmatpush1.bf16.msra.mxu0 0
    %1646 = vmatprep.subr.bf16.mxu0 0
    %1647 = vmatpush1.bf16.msra.mxu0 0
    %1648 = vmatprep.subr.bf16.mxu0 0
    %1649 = vmatpush1.bf16.msra.mxu0 0
    %1650 = vmatprep.subr.bf16.mxu0 0
    %1651 = vmatpush1.bf16.msra.mxu0 0
    %1652 = vmatprep.subr.bf16.mxu0 0
    %1653 = vmatpush1.bf16.msra.mxu0 0
    %1654 = vmatprep.subr.bf16.mxu0 0
    %1655 = vmatpush1.bf16.msra.mxu0 0
    %1656 = vmatprep.subr.bf16.mxu0 0
    %1657 = vmatpush1.bf16.msra.mxu0 0
    %1658 = vmatprep.subr.bf16.mxu0 0
    %1659 = vmatpush1.bf16.msra.mxu0 0
    %1660 = vmatprep.subr.bf16.mxu0 0
    %1661 = vmatpush1.bf16.msra.mxu0 0
    %1662 = vmatprep.subr.bf16.mxu0 0
    %1663 = vmatpush1.bf16.msra.mxu0 0
    %1664 = vmatprep.mubr.bf16.mxu0 0
    %1665 = vmatmul.mubr.bf16.gmra.mrb[0].mxu0 %v1630
    %v1666 = vpop.f32.mrb[0].mxu0
    %v1667 = vadd.f32 0.0, %v1666
    %v1668 = vpop.f32.mrb[0].mxu0
    %v1669 = vpop.f32.mrb[0].mxu0
    %v1670 = vpop.f32.mrb[0].mxu0
    %1671 = vdwg.mxu0
    %1673 = vrot.lane.b32.xlu0 %v1624, 32
    %v1674 = vpop.permute.xlu0 %1673
    %v1676 = vsel %vm213, %v1674, 0
    %1678 = vmatprep.subr.bf16.mxu0 0
    %1679 = vmatpush1.bf16.msra.mxu0 %v348
    %1680 = vmatprep.subr.bf16.mxu0 0
    %1681 = vmatpush1.bf16.msra.mxu0 %v349
    %1682 = vmatprep.subr.bf16.mxu0 0
    %1683 = vmatpush1.bf16.msra.mxu0 0
    %1684 = vmatprep.subr.bf16.mxu0 0
    %1685 = vmatpush1.bf16.msra.mxu0 0
    %1686 = vmatprep.subr.bf16.mxu0 0
    %1687 = vmatpush1.bf16.msra.mxu0 0
    %1688 = vmatprep.subr.bf16.mxu0 0
    %1689 = vmatpush1.bf16.msra.mxu0 0
    %1690 = vmatprep.subr.bf16.mxu0 0
    %1691 = vmatpush1.bf16.msra.mxu0 0
    %1692 = vmatprep.subr.bf16.mxu0 0
    %1693 = vmatpush1.bf16.msra.mxu0 0
    %1694 = vmatprep.subr.bf16.mxu0 0
    %1695 = vmatpush1.bf16.msra.mxu0 0
    %1696 = vmatprep.subr.bf16.mxu0 0
    %1697 = vmatpush1.bf16.msra.mxu0 0
    %1698 = vmatprep.subr.bf16.mxu0 0
    %1699 = vmatpush1.bf16.msra.mxu0 0
    %1700 = vmatprep.subr.bf16.mxu0 0
    %1701 = vmatpush1.bf16.msra.mxu0 0
    %1702 = vmatprep.subr.bf16.mxu0 0
    %1703 = vmatpush1.bf16.msra.mxu0 0
    %1704 = vmatprep.subr.bf16.mxu0 0
    %1705 = vmatpush1.bf16.msra.mxu0 0
    %1706 = vmatprep.subr.bf16.mxu0 0
    %1707 = vmatpush1.bf16.msra.mxu0 0
    %1708 = vmatprep.subr.bf16.mxu0 0
    %1709 = vmatpush1.bf16.msra.mxu0 0
    %1710 = vmatprep.mubr.bf16.mxu0 0
    %1711 = vmatmul.mubr.bf16.gmra.mrb[0].mxu0 %v1676
    %v1712 = vpop.f32.mrb[0].mxu0
    %v1713 = vadd.f32 %v1667, %v1712
    %v1714 = vpop.f32.mrb[0].mxu0
    %v1715 = vpop.f32.mrb[0].mxu0
    %v1716 = vpop.f32.mrb[0].mxu0
    %1717 = vdwg.mxu0
    %v1718 = vadd.f32 %v1713, %v190
    %v1719 = vmul.f32 %v1718, %v199
    %v1720 = vxor.u32 %v1719, 2147483648
    %v1721 = vmul.f32 %v1720, 1.442695
    %v1722 = vpow.pop %v1721
    %v1723 = vadd.f32 %v1722, 1.0
    %v1724 = vrcp.pop %v1723
    %v1725 = vmul.f32 1.0, %v1724
    %v1726 = vmul.f32 %v1725, 2.0
    %v1727 = vsub.f32 %v1726, 1.0
    %v1728 = vmul.f32 %v1725, %v1549
    %1730 = vrot.lane.b32.xlu0 %v1727, 64
    %v1731 = vpop.permute.xlu0 %1730
    %v1733 = vmul.f32 %v1725, %v1731
    %1735 = vrot.lane.b32.xlu0 %v1733, 32
    %v1736 = vpop.permute.xlu0 %1735
    %v1738 = vadd.f32 %v1728, %v1736
    %v1739 = vtanh.pop %v1738
    %1741 = vrot.lane.b32.xlu0 %v1739, 64
    %v1742 = vpop.permute.xlu0 %1741
    %v1744 = vmul.f32 %v1725, %v1742
    %v1745 = vld [vmem:[%s7] sm:$0x1]
    %v1747 = vlaneseq
    %v1748 = vshrl.u32 %v1747, 7
    %v1749 = vsub.s32 0, %v1748
    %v1750 = vrot.slane %v1745, %v1749
    %1751 = vrot.lane.b32.xlu0 %v1750, 96
    %v1752 = vpop.permute.xlu0 %1751
    %v1754 = vmul.f32 %v1744, %v1752
    %1756 = vrot.lane.b32.xlu0 %v1754, 32
    %v1757 = vpop.permute.xlu0 %1756
    %v1759 = vsel %vm213, %v1757, 0.0
    %1760 = vadd.xlane.f32.xlu0 %v1759
    %v1761 = vpop.xlane.xlu0 %1760
    %v1762 = vld [vmem:[#allocation3] sm:$0x1]
    %v1764 = vlaneseq
    %v1765 = vshrl.u32 %v1764, 7
    %v1766 = vsub.s32 0, %v1765
    %v1767 = vrot.slane %v1762, %v1766
    %v1769 = vadd.f32 %v1761, %v1767
    %vm1770 = vcmask 7168
    %1771 = vst.msk [vmem:[%s9] sm:$0xff] %vm1770, %v1769
    // Predicated region
    $region42: #{tpu_custom_call.1} parent=1 // pred_check
      _
    $region43: #{tpu_custom_call.1} parent=1 // pred_check_branch
      %1773 = sbr.rel (0) target = $region45
    $region44: #{tpu_custom_call.1} parent=1 // pred_region
      _
    $region45: #{tpu_custom_call.1} parent=1 // pred_fallthru
      _
    // Predicated region
    $region46: #{tpu_custom_call.1} parent=1 // pred_check
      _
    $region47: #{tpu_custom_call.1} parent=1 // pred_check_branch
      %1775 = sbr.rel (0) target = $region49
    $region48: #{tpu_custom_call.1} parent=1 // pred_region
      _
    $region49: #{tpu_custom_call.1} parent=1 // pred_fallthru
      _
    %1776 = vsyncpa [#allocation5], 1

</llo_original>
